<compile_context>
chip_gen: v5e
topology: v5e:2x2
jax: 0.10.0
libtpu: 0.0.40
codegen_flags: <defaults>
</compile_context>

<pallas_src>
import functools

import numpy as np
import jax
import jax.numpy as jnp
from jax.experimental import pallas as pl
from jax.experimental.pallas import tpu as pltpu

VERY_LARGE_NUMBER = 1e10

# actor_conf (hyper_param.actor_conf) defined in-script (synthetic, deterministic).
ACTOR_CONF = dict(
    node_input_dim=32,
    num_neurons=[32, 32],
    hidden_activation="relu",
    out_activation=None,
    spectral_norm=False,  # TODO(synk): spectral_norm weight reparam not applied (synthetic weights)
)
MOVE_DIM = 4


# ------------------------- fused actor kernel -------------------------
def _mlp3(x, w1, b1, w2, b2, w3, b3):
    h = jnp.maximum(jnp.dot(x, w1, preferred_element_type=jnp.float32) + b1, 0.0)
    h = jnp.maximum(jnp.dot(h, w2, preferred_element_type=jnp.float32) + b2, 0.0)
    return jnp.dot(h, w3, preferred_element_type=jnp.float32) + b3


def _actor_kernel(nf_ref, tgt_ref, mask_ref, rep_ref, rsh_ref, col_ref,
                  w1m_ref, b1m_ref, w2m_ref, b2m_ref, w3m_ref, b3m_ref,
                  w1h_ref, b1h_ref, w2h_ref, b2h_ref, w3h_ref, b3h_ref,
                  w1aa_ref, w1ae_ref, b1a_ref, w2a_ref, b2a_ref, w3a_ref, b3a_ref,
                  out_ref, *, use_hold):
    f32 = jnp.float32
    nf = nf_ref[...].astype(f32)                               # [Np, D]
    n_pad = nf.shape[0]

    # --- Move head: per-node 3-layer MLP ---------------------------------
    move = _mlp3(nf, w1m_ref[...], b1m_ref[...], w2m_ref[...], b2m_ref[...],
                 w3m_ref[...], b3m_ref[...])                   # [Np, move_dim]
    move_dim = move.shape[1]
    out_ref[:, 0:move_dim] = move.astype(out_ref.dtype)

    # --- Hold head (compute skipped statically when use_hold=False) ------
    if use_hold:
        hold = _mlp3(nf, w1h_ref[...], b1h_ref[...], w2h_ref[...], b2h_ref[...],
                     w3h_ref[...], b3h_ref[...])               # [Np, 1]
        out_ref[:, move_dim:move_dim + 1] = hold.astype(out_ref.dtype)
    else:
        out_ref[:, move_dim:move_dim + 1] = jnp.full(
            (n_pad, 1), -VERY_LARGE_NUMBER, out_ref.dtype)

    # --- Attack head: per-edge MLP without materializing concat features --
    # Layer-1 split: h1[edge(i,e)] = nf[i] @ W1_ally + nf[tgt(i,e)] @ W1_enemy + b1.
    ally_c = jnp.dot(nf, w1aa_ref[...], preferred_element_type=f32)    # [Np, H] (once per node)
    enemy_c = jnp.dot(nf, w1ae_ref[...], preferred_element_type=f32)   # [Np, H] (once per node)

    ne = tgt_ref.shape[0]
    tgt = tgt_ref[...]                                                 # [NE, 1] int32
    # One-hot MXU "gather" of the enemy contribution (avoids dynamic gather lowering).
    # TODO(synk): for large graphs replace the one-hot matmul with a real in-kernel gather/DMA.
    tgt_onehot = (tgt == jax.lax.broadcasted_iota(jnp.int32, (ne, n_pad), 1)).astype(f32)
    ally_rep = jnp.dot(rep_ref[...], ally_c, preferred_element_type=f32)    # [NE, H]
    enemy_rep = jnp.dot(tgt_onehot, enemy_c, preferred_element_type=f32)    # [NE, H]

    h = jnp.maximum(ally_rep + enemy_rep + b1a_ref[...], 0.0)
    h = jnp.maximum(jnp.dot(h, w2a_ref[...], preferred_element_type=f32) + b2a_ref[...], 0.0)
    s = jnp.dot(h, w3a_ref[...], preferred_element_type=f32) + b3a_ref[...]  # [NE, 1]

    # Lane-dense [Np, E] scores via a matmul "reshape":
    #   rsh[i, r] = 1{r // E == i},  col[r, e] = 1{r % E == e}
    scores = jnp.dot(rsh_ref[...], s * col_ref[...], preferred_element_type=f32)  # [Np, E]

    # Fused attack mask: slots without an attack edge -> -VERY_LARGE_NUMBER.
    # TODO(synk): nodes with zero attack edges receive all-zero rows in DGL; here they
    # receive fully masked (-VERY_LARGE_NUMBER) rows instead.
    attack = jnp.where(mask_ref[...] > 0, scores, -VERY_LARGE_NUMBER)
    out_ref[:, move_dim + 1:] = attack.astype(out_ref.dtype)


# ------------------------- deterministic parameter init -------------------------
def init_mlp(key, in_dim, hidden, out_dim):
    dims = [in_dim] + list(hidden) + [out_dim]
    params = []
    for i in range(len(dims) - 1):
        key, kw, kb = jax.random.split(key, 3)
        bound = 1.0 / (dims[i] ** 0.5)  # torch.nn.Linear default init
        w = jax.random.uniform(kw, (dims[i], dims[i + 1]), jnp.float32, -bound, bound)
        b = jax.random.uniform(kb, (1, dims[i + 1]), jnp.float32, -bound, bound)
        params += [w, b]
    return tuple(params)


def _round_up(x, m):
    return ((x + m - 1) // m) * m


# ------------------------- ActorModule wrapper -------------------------
class ActorModulePallas:
    def __init__(self, key, move_dim=MOVE_DIM, use_hold=True):
        d = ACTOR_CONF["node_input_dim"]
        nn_ = ACTOR_CONF["num_neurons"]
        k_move, k_hold, k_attack = jax.random.split(key, 3)
        self.move_dim = move_dim
        self.use_hold = use_hold
        self.node_dim = d
        self.move_params = init_mlp(k_move, d, nn_, move_dim)   # MoveModule MLP
        self.hold_params = init_mlp(k_hold, d, nn_, 1)          # HoldModule MLP
        w1a, b1a, w2a, b2a, w3a, b3a = init_mlp(k_attack, 2 * d, nn_, 1)  # AttackModule edge MLP
        # Split the attack MLP's first layer into ally / enemy halves so the
        # concat(ally_feat, enemy_feat) never has to be materialized.
        self.attack_params = (w1a[:d, :], w1a[d:, :], b1a, w2a, b2a, w3a, b3a)

    def __call__(self, node_feature, attack_targets, attack_mask, maximum_num_enemy):
        n, d = node_feature.shape
        e = maximum_num_enemy
        n_pad = max(_round_up(n, 8), 8)   # sublane-aligned row padding (no divisibility assert)
        ne = n_pad * e

        nf = jnp.zeros((n_pad, d), jnp.float32).at[:n].set(node_feature.astype(jnp.float32))
        tgt = jnp.zeros((n_pad, e), jnp.int32).at[:n].set(attack_targets.astype(jnp.int32))
        msk = jnp.zeros((n_pad, e), jnp.int32).at[:n].set(attack_mask.astype(jnp.int32))
        tgt_flat = tgt.reshape(ne, 1)
        # TODO(synk): out-of-range attack_targets produce a zero enemy contribution here
        # (one-hot misses) instead of jnp.take's clamping; masked slots are unaffected.

        # Static (data-independent) helper matrices for edge expansion / lane-dense reshape.
        r = np.arange(ne)
        rep_mat = (r[:, None] // e == np.arange(n_pad)[None, :]).astype(np.float32)  # [NE, Np]
        rsh_mat = np.ascontiguousarray(rep_mat.T)                                    # [Np, NE]
        col_mat = (r[:, None] % e == np.arange(e)[None, :]).astype(np.float32)       # [NE, E]

        inputs = (nf, tgt_flat, msk,
                  jnp.asarray(rep_mat), jnp.asarray(rsh_mat), jnp.asarray(col_mat),
                  *self.move_params, *self.hold_params, *self.attack_params)

        out_w = self.move_dim + 1 + e
        kernel = functools.partial(_actor_kernel, use_hold=self.use_hold)
        slab = pl.pallas_call(
            kernel,
            out_shape=jax.ShapeDtypeStruct((n_pad, out_w), jnp.float32),
            grid=(1,),  # single block: everything fits VMEM with huge margin at these sizes
            in_specs=[pl.BlockSpec(x.shape, lambda i: (0, 0)) for x in inputs],
            out_specs=pl.BlockSpec((n_pad, out_w), lambda i: (0, 0)),
            compiler_params=pltpu.CompilerParams(dimension_semantics=("arbitrary",)),
        )(*inputs)

        move_argument = slab[:n, :self.move_dim]
        hold_argument = slab[:n, self.move_dim:self.move_dim + 1]
        attack_argument = slab[:n, self.move_dim + 1:]
        return move_argument, hold_argument, attack_argument


if __name__ == "__main__":
    key = jax.random.PRNGKey(0)
    k_params, k_feat, k_tgt, k_mask = jax.random.split(key, 4)

    N = 16                    # number of graph nodes (allies + enemies)
    D = ACTOR_CONF["node_input_dim"]
    MAX_ENEMY = 8             # maximum_num_enemy

    node_feature = jax.random.normal(k_feat, (N, D), jnp.float32)
    attack_targets = jax.random.randint(k_tgt, (N, MAX_ENEMY), 0, N, jnp.int32)
    attack_mask = (jax.random.uniform(k_mask, (N, MAX_ENEMY)) > 0.5).astype(jnp.int32)

    actor = ActorModulePallas(k_params, move_dim=MOVE_DIM, use_hold=True)
    move_arg, hold_arg, attack_arg = actor(node_feature, attack_targets, attack_mask, MAX_ENEMY)
    jax.block_until_ready((move_arg, hold_arg, attack_arg))

    assert move_arg.shape == (N, MOVE_DIM)
    assert hold_arg.shape == (N, 1)
    assert attack_arg.shape == (N, MAX_ENEMY)
    assert bool(jnp.all(jnp.isfinite(move_arg)))
    print("KERNEL_OK")
</pallas_src>

<mosaic_0001>
module attributes {stable_mosaic.version = 11 : i64} {
  func.func @_actor_kernel(%arg0: i32, %arg1: memref<16x32xf32, #tpu.memory_space<vmem>>, %arg2: memref<128x1xi32, #tpu.memory_space<vmem>>, %arg3: memref<16x8xi32, #tpu.memory_space<vmem>>, %arg4: memref<128x16xf32, #tpu.memory_space<vmem>>, %arg5: memref<16x128xf32, #tpu.memory_space<vmem>>, %arg6: memref<128x8xf32, #tpu.memory_space<vmem>>, %arg7: memref<32x32xf32, #tpu.memory_space<vmem>>, %arg8: memref<1x32xf32, #tpu.memory_space<vmem>>, %arg9: memref<32x32xf32, #tpu.memory_space<vmem>>, %arg10: memref<1x32xf32, #tpu.memory_space<vmem>>, %arg11: memref<32x4xf32, #tpu.memory_space<vmem>>, %arg12: memref<1x4xf32, #tpu.memory_space<vmem>>, %arg13: memref<32x32xf32, #tpu.memory_space<vmem>>, %arg14: memref<1x32xf32, #tpu.memory_space<vmem>>, %arg15: memref<32x32xf32, #tpu.memory_space<vmem>>, %arg16: memref<1x32xf32, #tpu.memory_space<vmem>>, %arg17: memref<32x1xf32, #tpu.memory_space<vmem>>, %arg18: memref<1x1xf32, #tpu.memory_space<vmem>>, %arg19: memref<32x32xf32, #tpu.memory_space<vmem>>, %arg20: memref<32x32xf32, #tpu.memory_space<vmem>>, %arg21: memref<1x32xf32, #tpu.memory_space<vmem>>, %arg22: memref<32x32xf32, #tpu.memory_space<vmem>>, %arg23: memref<1x32xf32, #tpu.memory_space<vmem>>, %arg24: memref<32x1xf32, #tpu.memory_space<vmem>>, %arg25: memref<1x1xf32, #tpu.memory_space<vmem>>, %arg26: memref<16x13xf32, #tpu.memory_space<vmem>>) attributes {dimension_semantics = [#tpu.dimension_semantics<arbitrary>], iteration_bounds = array<i64: 1>, scalar_prefetch = 0 : i64, scratch_operands = 0 : i64, tpu.core_type = #tpu.core_type<tc>, window_params = [{pipeline_mode = #tpu.pipeline_mode<synchronous>, transform_indices = @transform_0, window_bounds = array<i64: 16, 32>}, {pipeline_mode = #tpu.pipeline_mode<synchronous>, transform_indices = @transform_1, window_bounds = array<i64: 128, 1>}, {pipeline_mode = #tpu.pipeline_mode<synchronous>, transform_indices = @transform_2, window_bounds = array<i64: 16, 8>}, {pipeline_mode = #tpu.pipeline_mode<synchronous>, transform_indices = @transform_3, window_bounds = array<i64: 128, 16>}, {pipeline_mode = #tpu.pipeline_mode<synchronous>, transform_indices = @transform_4, window_bounds = array<i64: 16, 128>}, {pipeline_mode = #tpu.pipeline_mode<synchronous>, transform_indices = @transform_5, window_bounds = array<i64: 128, 8>}, {pipeline_mode = #tpu.pipeline_mode<synchronous>, transform_indices = @transform_6, window_bounds = array<i64: 32, 32>}, {pipeline_mode = #tpu.pipeline_mode<synchronous>, transform_indices = @transform_7, window_bounds = array<i64: 1, 32>}, {pipeline_mode = #tpu.pipeline_mode<synchronous>, transform_indices = @transform_8, window_bounds = array<i64: 32, 32>}, {pipeline_mode = #tpu.pipeline_mode<synchronous>, transform_indices = @transform_9, window_bounds = array<i64: 1, 32>}, {pipeline_mode = #tpu.pipeline_mode<synchronous>, transform_indices = @transform_10, window_bounds = array<i64: 32, 4>}, {pipeline_mode = #tpu.pipeline_mode<synchronous>, transform_indices = @transform_11, window_bounds = array<i64: 1, 4>}, {pipeline_mode = #tpu.pipeline_mode<synchronous>, transform_indices = @transform_12, window_bounds = array<i64: 32, 32>}, {pipeline_mode = #tpu.pipeline_mode<synchronous>, transform_indices = @transform_13, window_bounds = array<i64: 1, 32>}, {pipeline_mode = #tpu.pipeline_mode<synchronous>, transform_indices = @transform_14, window_bounds = array<i64: 32, 32>}, {pipeline_mode = #tpu.pipeline_mode<synchronous>, transform_indices = @transform_15, window_bounds = array<i64: 1, 32>}, {pipeline_mode = #tpu.pipeline_mode<synchronous>, transform_indices = @transform_16, window_bounds = array<i64: 32, 1>}, {pipeline_mode = #tpu.pipeline_mode<synchronous>, transform_indices = @transform_17, window_bounds = array<i64: 1, 1>}, {pipeline_mode = #tpu.pipeline_mode<synchronous>, transform_indices = @transform_18, window_bounds = array<i64: 32, 32>}, {pipeline_mode = #tpu.pipeline_mode<synchronous>, transform_indices = @transform_19, window_bounds = array<i64: 32, 32>}, {pipeline_mode = #tpu.pipeline_mode<synchronous>, transform_indices = @transform_20, window_bounds = array<i64: 1, 32>}, {pipeline_mode = #tpu.pipeline_mode<synchronous>, transform_indices = @transform_21, window_bounds = array<i64: 32, 32>}, {pipeline_mode = #tpu.pipeline_mode<synchronous>, transform_indices = @transform_22, window_bounds = array<i64: 1, 32>}, {pipeline_mode = #tpu.pipeline_mode<synchronous>, transform_indices = @transform_23, window_bounds = array<i64: 32, 1>}, {pipeline_mode = #tpu.pipeline_mode<synchronous>, transform_indices = @transform_24, window_bounds = array<i64: 1, 1>}, {pipeline_mode = #tpu.pipeline_mode<synchronous>, transform_indices = @transform_25, window_bounds = array<i64: 16, 13>}]} {
    %c0 = arith.constant 0 : index
    %c0_0 = arith.constant 0 : index
    %0 = vector.load %arg1[%c0, %c0_0] : memref<16x32xf32, #tpu.memory_space<vmem>>, vector<16x32xf32>
    %c0_1 = arith.constant 0 : index
    %c0_2 = arith.constant 0 : index
    %1 = vector.load %arg7[%c0_1, %c0_2] : memref<32x32xf32, #tpu.memory_space<vmem>>, vector<32x32xf32>
    %c0_3 = arith.constant 0 : index
    %c0_4 = arith.constant 0 : index
    %2 = vector.load %arg8[%c0_3, %c0_4] : memref<1x32xf32, #tpu.memory_space<vmem>>, vector<1x32xf32>
    %c0_5 = arith.constant 0 : index
    %c0_6 = arith.constant 0 : index
    %3 = vector.load %arg9[%c0_5, %c0_6] : memref<32x32xf32, #tpu.memory_space<vmem>>, vector<32x32xf32>
    %c0_7 = arith.constant 0 : index
    %c0_8 = arith.constant 0 : index
    %4 = vector.load %arg10[%c0_7, %c0_8] : memref<1x32xf32, #tpu.memory_space<vmem>>, vector<1x32xf32>
    %c0_9 = arith.constant 0 : index
    %c0_10 = arith.constant 0 : index
    %5 = vector.load %arg11[%c0_9, %c0_10] : memref<32x4xf32, #tpu.memory_space<vmem>>, vector<32x4xf32>
    %c0_11 = arith.constant 0 : index
    %c0_12 = arith.constant 0 : index
    %6 = vector.load %arg12[%c0_11, %c0_12] : memref<1x4xf32, #tpu.memory_space<vmem>>, vector<1x4xf32>
    %cst = arith.constant dense<0.000000e+00> : vector<16x32xf32>
    %7 = tpu.matmul %0, %1, %cst {dimension_numbers = #tpu.dot_dimension_numbers<[1], [0], [0], [1], [0, 0, 1, 1], [], []>} : vector<16x32xf32>, vector<32x32xf32>, vector<16x32xf32> -> vector<16x32xf32>
    %8 = vector.broadcast %2 : vector<1x32xf32> to vector<16x32xf32>
    %9 = arith.addf %7, %8 : vector<16x32xf32>
    %cst_13 = arith.constant 0.000000e+00 : f32
    %10 = vector.broadcast %cst_13 : f32 to vector<16x32xf32>
    %11 = arith.maximumf %9, %10 : vector<16x32xf32>
    %cst_14 = arith.constant dense<0.000000e+00> : vector<16x32xf32>
    %12 = tpu.matmul %11, %3, %cst_14 {dimension_numbers = #tpu.dot_dimension_numbers<[1], [0], [0], [1], [0, 0, 1, 1], [], []>} : vector<16x32xf32>, vector<32x32xf32>, vector<16x32xf32> -> vector<16x32xf32>
    %13 = vector.broadcast %4 : vector<1x32xf32> to vector<16x32xf32>
    %14 = arith.addf %12, %13 : vector<16x32xf32>
    %cst_15 = arith.constant 0.000000e+00 : f32
    %15 = vector.broadcast %cst_15 : f32 to vector<16x32xf32>
    %16 = arith.maximumf %14, %15 : vector<16x32xf32>
    %cst_16 = arith.constant dense<0.000000e+00> : vector<16x4xf32>
    %17 = tpu.matmul %16, %5, %cst_16 {dimension_numbers = #tpu.dot_dimension_numbers<[1], [0], [0], [1], [0, 0, 1, 1], [], []>} : vector<16x32xf32>, vector<32x4xf32>, vector<16x4xf32> -> vector<16x4xf32>
    %18 = vector.broadcast %6 : vector<1x4xf32> to vector<16x4xf32>
    %19 = arith.addf %17, %18 : vector<16x4xf32>
    %c0_17 = arith.constant 0 : index
    %c0_18 = arith.constant 0 : index
    %20 = vector.load %arg26[%c0_17, %c0_18] : memref<16x13xf32, #tpu.memory_space<vmem>>, vector<16x4xf32>
    tpu.vector_store %arg26[%c0_17, %c0_18], %19 {strides = array<i32>} : memref<16x13xf32, #tpu.memory_space<vmem>>, vector<16x4xf32>,
    %c0_19 = arith.constant 0 : index
    %c0_20 = arith.constant 0 : index
    %21 = vector.load %arg13[%c0_19, %c0_20] : memref<32x32xf32, #tpu.memory_space<vmem>>, vector<32x32xf32>
    %c0_21 = arith.constant 0 : index
    %c0_22 = arith.constant 0 : index
    %22 = vector.load %arg14[%c0_21, %c0_22] : memref<1x32xf32, #tpu.memory_space<vmem>>, vector<1x32xf32>
    %c0_23 = arith.constant 0 : index
    %c0_24 = arith.constant 0 : index
    %23 = vector.load %arg15[%c0_23, %c0_24] : memref<32x32xf32, #tpu.memory_space<vmem>>, vector<32x32xf32>
    %c0_25 = arith.constant 0 : index
    %c0_26 = arith.constant 0 : index
    %24 = vector.load %arg16[%c0_25, %c0_26] : memref<1x32xf32, #tpu.memory_space<vmem>>, vector<1x32xf32>
    %c0_27 = arith.constant 0 : index
    %c0_28 = arith.constant 0 : index
    %25 = vector.load %arg17[%c0_27, %c0_28] : memref<32x1xf32, #tpu.memory_space<vmem>>, vector<32x1xf32>
    %c0_29 = arith.constant 0 : index
    %c0_30 = arith.constant 0 : index
    %26 = vector.load %arg18[%c0_29, %c0_30] : memref<1x1xf32, #tpu.memory_space<vmem>>, vector<1x1xf32>
    %cst_31 = arith.constant dense<0.000000e+00> : vector<16x32xf32>
    %27 = tpu.matmul %0, %21, %cst_31 {dimension_numbers = #tpu.dot_dimension_numbers<[1], [0], [0], [1], [0, 0, 1, 1], [], []>} : vector<16x32xf32>, vector<32x32xf32>, vector<16x32xf32> -> vector<16x32xf32>
    %28 = vector.broadcast %22 : vector<1x32xf32> to vector<16x32xf32>
    %29 = arith.addf %27, %28 : vector<16x32xf32>
    %cst_32 = arith.constant 0.000000e+00 : f32
    %30 = vector.broadcast %cst_32 : f32 to vector<16x32xf32>
    %31 = arith.maximumf %29, %30 : vector<16x32xf32>
    %cst_33 = arith.constant dense<0.000000e+00> : vector<16x32xf32>
    %32 = tpu.matmul %31, %23, %cst_33 {dimension_numbers = #tpu.dot_dimension_numbers<[1], [0], [0], [1], [0, 0, 1, 1], [], []>} : vector<16x32xf32>, vector<32x32xf32>, vector<16x32xf32> -> vector<16x32xf32>
    %33 = vector.broadcast %24 : vector<1x32xf32> to vector<16x32xf32>
    %34 = arith.addf %32, %33 : vector<16x32xf32>
    %cst_34 = arith.constant 0.000000e+00 : f32
    %35 = vector.broadcast %cst_34 : f32 to vector<16x32xf32>
    %36 = arith.maximumf %34, %35 : vector<16x32xf32>
    %cst_35 = arith.constant dense<0.000000e+00> : vector<16x1xf32>
    %37 = tpu.matmul %36, %25, %cst_35 {dimension_numbers = #tpu.dot_dimension_numbers<[1], [0], [0], [1], [0, 0, 1, 1], [], []>} : vector<16x32xf32>, vector<32x1xf32>, vector<16x1xf32> -> vector<16x1xf32>
    %38 = vector.broadcast %26 : vector<1x1xf32> to vector<16x1xf32>
    %39 = arith.addf %37, %38 : vector<16x1xf32>
    %c0_36 = arith.constant 0 : index
    %c4 = arith.constant 4 : index
    %40 = vector.load %arg26[%c0_36, %c4] : memref<16x13xf32, #tpu.memory_space<vmem>>, vector<16x1xf32>
    tpu.vector_store %arg26[%c0_36, %c4], %39 {strides = array<i32>} : memref<16x13xf32, #tpu.memory_space<vmem>>, vector<16x1xf32>,
    %c0_37 = arith.constant 0 : index
    %c0_38 = arith.constant 0 : index
    %41 = vector.load %arg19[%c0_37, %c0_38] : memref<32x32xf32, #tpu.memory_space<vmem>>, vector<32x32xf32>
    %cst_39 = arith.constant dense<0.000000e+00> : vector<16x32xf32>
    %42 = tpu.matmul %0, %41, %cst_39 {dimension_numbers = #tpu.dot_dimension_numbers<[1], [0], [0], [1], [0, 0, 1, 1], [], []>} : vector<16x32xf32>, vector<32x32xf32>, vector<16x32xf32> -> vector<16x32xf32>
    %c0_40 = arith.constant 0 : index
    %c0_41 = arith.constant 0 : index
    %43 = vector.load %arg20[%c0_40, %c0_41] : memref<32x32xf32, #tpu.memory_space<vmem>>, vector<32x32xf32>
    %cst_42 = arith.constant dense<0.000000e+00> : vector<16x32xf32>
    %44 = tpu.matmul %0, %43, %cst_42 {dimension_numbers = #tpu.dot_dimension_numbers<[1], [0], [0], [1], [0, 0, 1, 1], [], []>} : vector<16x32xf32>, vector<32x32xf32>, vector<16x32xf32> -> vector<16x32xf32>
    %c0_43 = arith.constant 0 : index
    %c0_44 = arith.constant 0 : index
    %45 = vector.load %arg2[%c0_43, %c0_44] : memref<128x1xi32, #tpu.memory_space<vmem>>, vector<128x1xi32>
    %46 = tpu.iota {dimensions = array<i32: 1>} : vector<128x16xi32>
    %47 = vector.broadcast %45 : vector<128x1xi32> to vector<128x16xi32>
    %48 = arith.cmpi eq, %47, %46 : vector<128x16xi32>
    %49 = arith.extui %48 : vector<128x16xi1> to vector<128x16xi32>
    %50 = arith.sitofp %49 : vector<128x16xi32> to vector<128x16xf32>
    %c0_45 = arith.constant 0 : index
    %c0_46 = arith.constant 0 : index
    %51 = vector.load %arg4[%c0_45, %c0_46] : memref<128x16xf32, #tpu.memory_space<vmem>>, vector<128x16xf32>
    %cst_47 = arith.constant dense<0.000000e+00> : vector<128x32xf32>
    %52 = tpu.matmul %51, %42, %cst_47 {dimension_numbers = #tpu.dot_dimension_numbers<[1], [0], [0], [1], [0, 0, 1, 1], [], []>} : vector<128x16xf32>, vector<16x32xf32>, vector<128x32xf32> -> vector<128x32xf32>
    %cst_48 = arith.constant dense<0.000000e+00> : vector<128x32xf32>
    %53 = tpu.matmul %50, %44, %cst_48 {dimension_numbers = #tpu.dot_dimension_numbers<[1], [0], [0], [1], [0, 0, 1, 1], [], []>} : vector<128x16xf32>, vector<16x32xf32>, vector<128x32xf32> -> vector<128x32xf32>
    %54 = arith.addf %52, %53 : vector<128x32xf32>
    %c0_49 = arith.constant 0 : index
    %c0_50 = arith.constant 0 : index
    %55 = vector.load %arg21[%c0_49, %c0_50] : memref<1x32xf32, #tpu.memory_space<vmem>>, vector<1x32xf32>
    %56 = vector.broadcast %55 : vector<1x32xf32> to vector<128x32xf32>
    %57 = arith.addf %54, %56 : vector<128x32xf32>
    %cst_51 = arith.constant 0.000000e+00 : f32
    %58 = vector.broadcast %cst_51 : f32 to vector<128x32xf32>
    %59 = arith.maximumf %57, %58 : vector<128x32xf32>
    %c0_52 = arith.constant 0 : index
    %c0_53 = arith.constant 0 : index
    %60 = vector.load %arg22[%c0_52, %c0_53] : memref<32x32xf32, #tpu.memory_space<vmem>>, vector<32x32xf32>
    %cst_54 = arith.constant dense<0.000000e+00> : vector<128x32xf32>
    %61 = tpu.matmul %59, %60, %cst_54 {dimension_numbers = #tpu.dot_dimension_numbers<[1], [0], [0], [1], [0, 0, 1, 1], [], []>} : vector<128x32xf32>, vector<32x32xf32>, vector<128x32xf32> -> vector<128x32xf32>
    %c0_55 = arith.constant 0 : index
    %c0_56 = arith.constant 0 : index
    %62 = vector.load %arg23[%c0_55, %c0_56] : memref<1x32xf32, #tpu.memory_space<vmem>>, vector<1x32xf32>
    %63 = vector.broadcast %62 : vector<1x32xf32> to vector<128x32xf32>
    %64 = arith.addf %61, %63 : vector<128x32xf32>
    %cst_57 = arith.constant 0.000000e+00 : f32
    %65 = vector.broadcast %cst_57 : f32 to vector<128x32xf32>
    %66 = arith.maximumf %64, %65 : vector<128x32xf32>
    %c0_58 = arith.constant 0 : index
    %c0_59 = arith.constant 0 : index
    %67 = vector.load %arg24[%c0_58, %c0_59] : memref<32x1xf32, #tpu.memory_space<vmem>>, vector<32x1xf32>
    %cst_60 = arith.constant dense<0.000000e+00> : vector<128x1xf32>
    %68 = tpu.matmul %66, %67, %cst_60 {dimension_numbers = #tpu.dot_dimension_numbers<[1], [0], [0], [1], [0, 0, 1, 1], [], []>} : vector<128x32xf32>, vector<32x1xf32>, vector<128x1xf32> -> vector<128x1xf32>
    %c0_61 = arith.constant 0 : index
    %c0_62 = arith.constant 0 : index
    %69 = vector.load %arg25[%c0_61, %c0_62] : memref<1x1xf32, #tpu.memory_space<vmem>>, vector<1x1xf32>
    %70 = vector.broadcast %69 : vector<1x1xf32> to vector<128x1xf32>
    %71 = arith.addf %68, %70 : vector<128x1xf32>
    %c0_63 = arith.constant 0 : index
    %c0_64 = arith.constant 0 : index
    %72 = vector.load %arg5[%c0_63, %c0_64] : memref<16x128xf32, #tpu.memory_space<vmem>>, vector<16x128xf32>
    %c0_65 = arith.constant 0 : index
    %c0_66 = arith.constant 0 : index
    %73 = vector.load %arg6[%c0_65, %c0_66] : memref<128x8xf32, #tpu.memory_space<vmem>>, vector<128x8xf32>
    %74 = vector.broadcast %71 : vector<128x1xf32> to vector<128x8xf32>
    %75 = arith.mulf %74, %73 : vector<128x8xf32>
    %cst_67 = arith.constant dense<0.000000e+00> : vector<16x8xf32>
    %76 = tpu.matmul %72, %75, %cst_67 {dimension_numbers = #tpu.dot_dimension_numbers<[1], [0], [0], [1], [0, 0, 1, 1], [], []>} : vector<16x128xf32>, vector<128x8xf32>, vector<16x8xf32> -> vector<16x8xf32>
    %c0_68 = arith.constant 0 : index
    %c0_69 = arith.constant 0 : index
    %77 = vector.load %arg3[%c0_68, %c0_69] : memref<16x8xi32, #tpu.memory_space<vmem>>, vector<16x8xi32>
    %c0_i32 = arith.constant 0 : i32
    %78 = vector.broadcast %c0_i32 : i32 to vector<16x8xi32>
    %79 = arith.cmpi sgt, %77, %78 : vector<16x8xi32>
    %cst_70 = arith.constant -1.000000e+10 : f32
    %80 = vector.broadcast %cst_70 : f32 to vector<16x8xf32>
    %81 = arith.select %79, %76, %80 : vector<16x8xi1>, vector<16x8xf32>
    %c0_71 = arith.constant 0 : index
    %c5 = arith.constant 5 : index
    %82 = vector.load %arg26[%c0_71, %c5] : memref<16x13xf32, #tpu.memory_space<vmem>>, vector<16x8xf32>
    tpu.vector_store %arg26[%c0_71, %c5], %81 {strides = array<i32>} : memref<16x13xf32, #tpu.memory_space<vmem>>, vector<16x8xf32>,
    return
  }
  func.func @transform_0(%arg0: i32) -> (i32, i32) {
    %c0_i32 = arith.constant 0 : i32
    %c0_i32_0 = arith.constant 0 : i32
    %c0_i32_1 = arith.constant 0 : i32
    return %c0_i32, %c0_i32_0 : i32, i32
  }
  func.func @transform_1(%arg0: i32) -> (i32, i32) {
    %c0_i32 = arith.constant 0 : i32
    %c0_i32_0 = arith.constant 0 : i32
    %c0_i32_1 = arith.constant 0 : i32
    return %c0_i32, %c0_i32_0 : i32, i32
  }
  func.func @transform_2(%arg0: i32) -> (i32, i32) {
    %c0_i32 = arith.constant 0 : i32
    %c0_i32_0 = arith.constant 0 : i32
    %c0_i32_1 = arith.constant 0 : i32
    return %c0_i32, %c0_i32_0 : i32, i32
  }
  func.func @transform_3(%arg0: i32) -> (i32, i32) {
    %c0_i32 = arith.constant 0 : i32
    %c0_i32_0 = arith.constant 0 : i32
    %c0_i32_1 = arith.constant 0 : i32
    return %c0_i32, %c0_i32_0 : i32, i32
  }
  func.func @transform_4(%arg0: i32) -> (i32, i32) {
    %c0_i32 = arith.constant 0 : i32
    %c0_i32_0 = arith.constant 0 : i32
    %c0_i32_1 = arith.constant 0 : i32
    return %c0_i32, %c0_i32_0 : i32, i32
  }
  func.func @transform_5(%arg0: i32) -> (i32, i32) {
    %c0_i32 = arith.constant 0 : i32
    %c0_i32_0 = arith.constant 0 : i32
    %c0_i32_1 = arith.constant 0 : i32
    return %c0_i32, %c0_i32_0 : i32, i32
  }
  func.func @transform_6(%arg0: i32) -> (i32, i32) {
    %c0_i32 = arith.constant 0 : i32
    %c0_i32_0 = arith.constant 0 : i32
    %c0_i32_1 = arith.constant 0 : i32
    return %c0_i32, %c0_i32_0 : i32, i32
  }
  func.func @transform_7(%arg0: i32) -> (i32, i32) {
    %c0_i32 = arith.constant 0 : i32
    %c0_i32_0 = arith.constant 0 : i32
    %c0_i32_1 = arith.constant 0 : i32
    return %c0_i32, %c0_i32_0 : i32, i32
  }
  func.func @transform_8(%arg0: i32) -> (i32, i32) {
    %c0_i32 = arith.constant 0 : i32
    %c0_i32_0 = arith.constant 0 : i32
    %c0_i32_1 = arith.constant 0 : i32
    return %c0_i32, %c0_i32_0 : i32, i32
  }
  func.func @transform_9(%arg0: i32) -> (i32, i32) {
    %c0_i32 = arith.constant 0 : i32
    %c0_i32_0 = arith.constant 0 : i32
    %c0_i32_1 = arith.constant 0 : i32
    return %c0_i32, %c0_i32_0 : i32, i32
  }
  func.func @transform_10(%arg0: i32) -> (i32, i32) {
    %c0_i32 = arith.constant 0 : i32
    %c0_i32_0 = arith.constant 0 : i32
    %c0_i32_1 = arith.constant 0 : i32
    return %c0_i32, %c0_i32_0 : i32, i32
  }
  func.func @transform_11(%arg0: i32) -> (i32, i32) {
    %c0_i32 = arith.constant 0 : i32
    %c0_i32_0 = arith.constant 0 : i32
    %c0_i32_1 = arith.constant 0 : i32
    return %c0_i32, %c0_i32_0 : i32, i32
  }
  func.func @transform_12(%arg0: i32) -> (i32, i32) {
    %c0_i32 = arith.constant 0 : i32
    %c0_i32_0 = arith.constant 0 : i32
    %c0_i32_1 = arith.constant 0 : i32
    return %c0_i32, %c0_i32_0 : i32, i32
  }
  func.func @transform_13(%arg0: i32) -> (i32, i32) {
    %c0_i32 = arith.constant 0 : i32
    %c0_i32_0 = arith.constant 0 : i32
    %c0_i32_1 = arith.constant 0 : i32
    return %c0_i32, %c0_i32_0 : i32, i32
  }
  func.func @transform_14(%arg0: i32) -> (i32, i32) {
    %c0_i32 = arith.constant 0 : i32
    %c0_i32_0 = arith.constant 0 : i32
    %c0_i32_1 = arith.constant 0 : i32
    return %c0_i32, %c0_i32_0 : i32, i32
  }
  func.func @transform_15(%arg0: i32) -> (i32, i32) {
    %c0_i32 = arith.constant 0 : i32
    %c0_i32_0 = arith.constant 0 : i32
    %c0_i32_1 = arith.constant 0 : i32
    return %c0_i32, %c0_i32_0 : i32, i32
  }
  func.func @transform_16(%arg0: i32) -> (i32, i32) {
    %c0_i32 = arith.constant 0 : i32
    %c0_i32_0 = arith.constant 0 : i32
    %c0_i32_1 = arith.constant 0 : i32
    return %c0_i32, %c0_i32_0 : i32, i32
  }
  func.func @transform_17(%arg0: i32) -> (i32, i32) {
    %c0_i32 = arith.constant 0 : i32
    %c0_i32_0 = arith.constant 0 : i32
    %c0_i32_1 = arith.constant 0 : i32
    return %c0_i32, %c0_i32_0 : i32, i32
  }
  func.func @transform_18(%arg0: i32) -> (i32, i32) {
    %c0_i32 = arith.constant 0 : i32
    %c0_i32_0 = arith.constant 0 : i32
    %c0_i32_1 = arith.constant 0 : i32
    return %c0_i32, %c0_i32_0 : i32, i32
  }
  func.func @transform_19(%arg0: i32) -> (i32, i32) {
    %c0_i32 = arith.constant 0 : i32
    %c0_i32_0 = arith.constant 0 : i32
    %c0_i32_1 = arith.constant 0 : i32
    return %c0_i32, %c0_i32_0 : i32, i32
  }
  func.func @transform_20(%arg0: i32) -> (i32, i32) {
    %c0_i32 = arith.constant 0 : i32
    %c0_i32_0 = arith.constant 0 : i32
    %c0_i32_1 = arith.constant 0 : i32
    return %c0_i32, %c0_i32_0 : i32, i32
  }
  func.func @transform_21(%arg0: i32) -> (i32, i32) {
    %c0_i32 = arith.constant 0 : i32
    %c0_i32_0 = arith.constant 0 : i32
    %c0_i32_1 = arith.constant 0 : i32
    return %c0_i32, %c0_i32_0 : i32, i32
  }
  func.func @transform_22(%arg0: i32) -> (i32, i32) {
    %c0_i32 = arith.constant 0 : i32
    %c0_i32_0 = arith.constant 0 : i32
    %c0_i32_1 = arith.constant 0 : i32
    return %c0_i32, %c0_i32_0 : i32, i32
  }
  func.func @transform_23(%arg0: i32) -> (i32, i32) {
    %c0_i32 = arith.constant 0 : i32
    %c0_i32_0 = arith.constant 0 : i32
    %c0_i32_1 = arith.constant 0 : i32
    return %c0_i32, %c0_i32_0 : i32, i32
  }
  func.func @transform_24(%arg0: i32) -> (i32, i32) {
    %c0_i32 = arith.constant 0 : i32
    %c0_i32_0 = arith.constant 0 : i32
    %c0_i32_1 = arith.constant 0 : i32
    return %c0_i32, %c0_i32_0 : i32, i32
  }
  func.func @transform_25(%arg0: i32) -> (i32, i32) {
    %c0_i32 = arith.constant 0 : i32
    %c0_i32_0 = arith.constant 0 : i32
    %c0_i32_1 = arith.constant 0 : i32
    return %c0_i32, %c0_i32_0 : i32, i32
  }
}

</mosaic_0001>

<llo_original>
// kernel: tpu_custom_call.1
$region0: #{tpu_custom_call.1}
  #allocation0 [shape = 'u32[]', space=smem, size = 0x4, offset = 0x4, fixed_abs, tag = 'smem constant byte address 0x4 - core index']
  #allocation1 [shape = 'u32[72,128]{1,0:T(1,128)}', space=vmem, size = 0x9000, scoped, tag = 'internal scratch']
  #allocation2 [shape = 'f32[1,1]{1,0:T(1,128)S(1)}', space=vmem, size = 0x200, scoped, tag = 'scoped memory for tpu_custom_call.1']
  #allocation3 [shape = 'f32[1,1]{1,0:T(1,128)S(1)}', space=vmem, size = 0x200, scoped, tag = 'scoped memory for tpu_custom_call.1']
  %s0 = inlined_call_operand.vmem [shape: f32[16,32], index: 0, kind: input, shape index: {}]
  %s1 = inlined_call_operand.vmem [shape: s32[128,1], index: 1, kind: input, shape index: {}]
  %s2 = inlined_call_operand.vmem [shape: s32[16,8], index: 2, kind: input, shape index: {}]
  %s3 = inlined_call_operand.vmem [shape: f32[128,16], index: 3, kind: input, shape index: {}]
  %s4 = inlined_call_operand.vmem [shape: f32[16,128], index: 4, kind: input, shape index: {}]
  %s5 = inlined_call_operand.vmem [shape: f32[128,8], index: 5, kind: input, shape index: {}]
  %s6 = inlined_call_operand.vmem [shape: f32[32,32], index: 6, kind: input, shape index: {}]
  %s7 = inlined_call_operand.vmem [shape: f32[1,32], index: 7, kind: input, shape index: {}]
  %s8 = inlined_call_operand.vmem [shape: f32[32,32], index: 8, kind: input, shape index: {}]
  %s9 = inlined_call_operand.vmem [shape: f32[1,32], index: 9, kind: input, shape index: {}]
  %s10 = inlined_call_operand.vmem [shape: f32[32,4], index: 10, kind: input, shape index: {}]
  %s11 = inlined_call_operand.vmem [shape: f32[1,4], index: 11, kind: input, shape index: {}]
  %s12 = inlined_call_operand.vmem [shape: f32[32,32], index: 12, kind: input, shape index: {}]
  %s13 = inlined_call_operand.vmem [shape: f32[1,32], index: 13, kind: input, shape index: {}]
  %s14 = inlined_call_operand.vmem [shape: f32[32,32], index: 14, kind: input, shape index: {}]
  %s15 = inlined_call_operand.vmem [shape: f32[1,32], index: 15, kind: input, shape index: {}]
  %s16 = inlined_call_operand.vmem [shape: f32[32,1], index: 16, kind: input, shape index: {}]
  %s17 = inlined_call_operand.<no memory space> [shape: f32[1,1], index: 17, kind: input, shape index: {}]
  %s18 = inlined_call_operand.vmem [shape: f32[32,32], index: 18, kind: input, shape index: {}]
  %s19 = inlined_call_operand.vmem [shape: f32[32,32], index: 19, kind: input, shape index: {}]
  %s20 = inlined_call_operand.vmem [shape: f32[1,32], index: 20, kind: input, shape index: {}]
  %s21 = inlined_call_operand.vmem [shape: f32[32,32], index: 21, kind: input, shape index: {}]
  %s22 = inlined_call_operand.vmem [shape: f32[1,32], index: 22, kind: input, shape index: {}]
  %s23 = inlined_call_operand.vmem [shape: f32[32,1], index: 23, kind: input, shape index: {}]
  %s24 = inlined_call_operand.<no memory space> [shape: f32[1,1], index: 24, kind: input, shape index: {}]
  %s25 = inlined_call_operand.hbm [shape: f32[16,13], index: 25, kind: output, shape index: {}]
  %s26 = sld [smem:[#allocation0]]
  $region110: #{tpu_custom_call.1} parent=0
    _
  %s28 = ssub.s32 1, %s26
  %s29 = scalar_select 0, %s28, %s26
  %v30 = vstv %s17
  %31 = vst [vmem:[#allocation2] sm:$0x1] %v30
  %v32 = vstv %s24
  %33 = vst [vmem:[#allocation3] sm:$0x1] %v32
  $region1: #{tpu_custom_call.1} parent=0
    #allocation4 [shape = 'u8[8192]{0}', space=vmem, size = 0x2000, scoped, tag = 'output window, operand 0, single buffered']
    #allocation5 [shape = 's32[1]{0}', space=sflag, size = 0x4, scoped, tag = 'scoped memory for tpu_custom_call.1']
    %34 = vsyncpa [#allocation5], 0
    // Predicated region
    $region2: #{tpu_custom_call.1} parent=1 // pred_check
      _
    $region3: #{tpu_custom_call.1} parent=1 // pred_check_branch
      %36 = sbr.rel (0) target = $region5
    $region4: #{tpu_custom_call.1} parent=1 // pred_region
      _
    $region5: #{tpu_custom_call.1} parent=1 // pred_fallthru
      _
    // Predicated region
    $region6: #{tpu_custom_call.1} parent=1 // pred_check
      _
    $region7: #{tpu_custom_call.1} parent=1 // pred_check_branch
      %38 = sbr.rel (0) target = $region9
    $region8: #{tpu_custom_call.1} parent=1 // pred_region
      _
    $region9: #{tpu_custom_call.1} parent=1 // pred_fallthru
      _
    // Predicated region
    $region10: #{tpu_custom_call.1} parent=1 // pred_check
      _
    $region11: #{tpu_custom_call.1} parent=1 // pred_check_branch
      %40 = sbr.rel (0) target = $region13
    $region12: #{tpu_custom_call.1} parent=1 // pred_region
      _
    $region13: #{tpu_custom_call.1} parent=1 // pred_fallthru
      _
    // Predicated region
    $region14: #{tpu_custom_call.1} parent=1 // pred_check
      _
    $region15: #{tpu_custom_call.1} parent=1 // pred_check_branch
      %42 = sbr.rel (0) target = $region17
    $region16: #{tpu_custom_call.1} parent=1 // pred_region
      _
    $region17: #{tpu_custom_call.1} parent=1 // pred_fallthru
      _
    // Predicated region
    $region18: #{tpu_custom_call.1} parent=1 // pred_check
      _
    $region19: #{tpu_custom_call.1} parent=1 // pred_check_branch
      %44 = sbr.rel (0) target = $region21
    $region20: #{tpu_custom_call.1} parent=1 // pred_region
      _
    $region21: #{tpu_custom_call.1} parent=1 // pred_fallthru
      _
    // Predicated region
    $region22: #{tpu_custom_call.1} parent=1 // pred_check
      _
    $region23: #{tpu_custom_call.1} parent=1 // pred_check_branch
      %46 = sbr.rel (0) target = $region25
    $region24: #{tpu_custom_call.1} parent=1 // pred_region
      _
    $region25: #{tpu_custom_call.1} parent=1 // pred_fallthru
      _
    // Predicated region
    $region26: #{tpu_custom_call.1} parent=1 // pred_check
      _
    $region27: #{tpu_custom_call.1} parent=1 // pred_check_branch
      %48 = sbr.rel (0) target = $region29
    $region28: #{tpu_custom_call.1} parent=1 // pred_region
      _
    $region29: #{tpu_custom_call.1} parent=1 // pred_fallthru
      _
    // Predicated region
    $region30: #{tpu_custom_call.1} parent=1 // pred_check
      _
    $region31: #{tpu_custom_call.1} parent=1 // pred_check_branch
      %50 = sbr.rel (0) target = $region33
    $region32: #{tpu_custom_call.1} parent=1 // pred_region
      _
    $region33: #{tpu_custom_call.1} parent=1 // pred_fallthru
      _
    // Predicated region
    $region34: #{tpu_custom_call.1} parent=1 // pred_check
      _
    $region35: #{tpu_custom_call.1} parent=1 // pred_check_branch
      %52 = sbr.rel (0) target = $region37
    $region36: #{tpu_custom_call.1} parent=1 // pred_region
      _
    $region37: #{tpu_custom_call.1} parent=1 // pred_fallthru
      _
    // Predicated region
    $region38: #{tpu_custom_call.1} parent=1 // pred_check
      _
    $region39: #{tpu_custom_call.1} parent=1 // pred_check_branch
      %54 = sbr.rel (0) target = $region41
    $region40: #{tpu_custom_call.1} parent=1 // pred_region
      _
    $region41: #{tpu_custom_call.1} parent=1 // pred_fallthru
      _
    // Predicated region
    $region42: #{tpu_custom_call.1} parent=1 // pred_check
      _
    $region43: #{tpu_custom_call.1} parent=1 // pred_check_branch
      %56 = sbr.rel (0) target = $region45
    $region44: #{tpu_custom_call.1} parent=1 // pred_region
      _
    $region45: #{tpu_custom_call.1} parent=1 // pred_fallthru
      _
    // Predicated region
    $region46: #{tpu_custom_call.1} parent=1 // pred_check
      _
    $region47: #{tpu_custom_call.1} parent=1 // pred_check_branch
      %58 = sbr.rel (0) target = $region49
    $region48: #{tpu_custom_call.1} parent=1 // pred_region
      _
    $region49: #{tpu_custom_call.1} parent=1 // pred_fallthru
      _
    // Predicated region
    $region50: #{tpu_custom_call.1} parent=1 // pred_check
      _
    $region51: #{tpu_custom_call.1} parent=1 // pred_check_branch
      %60 = sbr.rel (0) target = $region53
    $region52: #{tpu_custom_call.1} parent=1 // pred_region
      _
    $region53: #{tpu_custom_call.1} parent=1 // pred_fallthru
      _
    // Predicated region
    $region54: #{tpu_custom_call.1} parent=1 // pred_check
      _
    $region55: #{tpu_custom_call.1} parent=1 // pred_check_branch
      %62 = sbr.rel (0) target = $region57
    $region56: #{tpu_custom_call.1} parent=1 // pred_region
      _
    $region57: #{tpu_custom_call.1} parent=1 // pred_fallthru
      _
    // Predicated region
    $region58: #{tpu_custom_call.1} parent=1 // pred_check
      _
    $region59: #{tpu_custom_call.1} parent=1 // pred_check_branch
      %64 = sbr.rel (0) target = $region61
    $region60: #{tpu_custom_call.1} parent=1 // pred_region
      _
    $region61: #{tpu_custom_call.1} parent=1 // pred_fallthru
      _
    // Predicated region
    $region62: #{tpu_custom_call.1} parent=1 // pred_check
      _
    $region63: #{tpu_custom_call.1} parent=1 // pred_check_branch
      %66 = sbr.rel (0) target = $region65
    $region64: #{tpu_custom_call.1} parent=1 // pred_region
      _
    $region65: #{tpu_custom_call.1} parent=1 // pred_fallthru
      _
    // Predicated region
    $region66: #{tpu_custom_call.1} parent=1 // pred_check
      _
    $region67: #{tpu_custom_call.1} parent=1 // pred_check_branch
      %68 = sbr.rel (0) target = $region69
    $region68: #{tpu_custom_call.1} parent=1 // pred_region
      _
    $region69: #{tpu_custom_call.1} parent=1 // pred_fallthru
      _
    // Predicated region
    $region70: #{tpu_custom_call.1} parent=1 // pred_check
      _
    $region71: #{tpu_custom_call.1} parent=1 // pred_check_branch
      %70 = sbr.rel (0) target = $region73
    $region72: #{tpu_custom_call.1} parent=1 // pred_region
      _
    $region73: #{tpu_custom_call.1} parent=1 // pred_fallthru
      _
    // Predicated region
    $region74: #{tpu_custom_call.1} parent=1 // pred_check
      _
    $region75: #{tpu_custom_call.1} parent=1 // pred_check_branch
      %72 = sbr.rel (0) target = $region77
    $region76: #{tpu_custom_call.1} parent=1 // pred_region
      _
    $region77: #{tpu_custom_call.1} parent=1 // pred_fallthru
      _
    // Predicated region
    $region78: #{tpu_custom_call.1} parent=1 // pred_check
      _
    $region79: #{tpu_custom_call.1} parent=1 // pred_check_branch
      %74 = sbr.rel (0) target = $region81
    $region80: #{tpu_custom_call.1} parent=1 // pred_region
      _
    $region81: #{tpu_custom_call.1} parent=1 // pred_fallthru
      _
    // Predicated region
    $region82: #{tpu_custom_call.1} parent=1 // pred_check
      _
    $region83: #{tpu_custom_call.1} parent=1 // pred_check_branch
      %76 = sbr.rel (0) target = $region85
    $region84: #{tpu_custom_call.1} parent=1 // pred_region
      _
    $region85: #{tpu_custom_call.1} parent=1 // pred_fallthru
      _
    // Predicated region
    $region86: #{tpu_custom_call.1} parent=1 // pred_check
      _
    $region87: #{tpu_custom_call.1} parent=1 // pred_check_branch
      %78 = sbr.rel (0) target = $region89
    $region88: #{tpu_custom_call.1} parent=1 // pred_region
      _
    $region89: #{tpu_custom_call.1} parent=1 // pred_fallthru
      _
    // Predicated region
    $region90: #{tpu_custom_call.1} parent=1 // pred_check
      _
    $region91: #{tpu_custom_call.1} parent=1 // pred_check_branch
      %80 = sbr.rel (0) target = $region93
    $region92: #{tpu_custom_call.1} parent=1 // pred_region
      _
    $region93: #{tpu_custom_call.1} parent=1 // pred_fallthru
      _
    // Predicated region
    $region94: #{tpu_custom_call.1} parent=1 // pred_check
      _
    $region95: #{tpu_custom_call.1} parent=1 // pred_check_branch
      %82 = sbr.rel (0) target = $region97
    $region96: #{tpu_custom_call.1} parent=1 // pred_region
      _
    $region97: #{tpu_custom_call.1} parent=1 // pred_fallthru
      _
    // Predicated region
    $region98: #{tpu_custom_call.1} parent=1 // pred_check
      _
    $region99: #{tpu_custom_call.1} parent=1 // pred_check_branch
      %84 = sbr.rel (0) target = $region101
    $region100: #{tpu_custom_call.1} parent=1 // pred_region
      _
    $region101: #{tpu_custom_call.1} parent=1 // pred_fallthru
      _
    %v85 = vld [vmem:[%s0] sm:$0xff]
    %v86 = vld [vmem:[%s0 + $0x8] sm:$0xff]
    %v87 = vld [vmem:[%s6] sm:$0xff]
    %v88 = vld [vmem:[%s6 + $0x8] sm:$0xff]
    %v89 = vld [vmem:[%s6 + $0x10] sm:$0xff]
    %v90 = vld [vmem:[%s6 + $0x18] sm:$0xff]
    %v91 = vld [vmem:[%s7] sm:$0x1]
    %v92 = vld [vmem:[%s8] sm:$0xff]
    %v93 = vld [vmem:[%s8 + $0x8] sm:$0xff]
    %v94 = vld [vmem:[%s8 + $0x10] sm:$0xff]
    %v95 = vld [vmem:[%s8 + $0x18] sm:$0xff]
    %v96 = vld [vmem:[%s9] sm:$0x1]
    %v97 = vld [vmem:[%s10] sm:$0xff]
    %v98 = vld [vmem:[%s10 + $0x8] sm:$0xff]
    %v99 = vld [vmem:[%s10 + $0x10] sm:$0xff]
    %v100 = vld [vmem:[%s10 + $0x18] sm:$0xff]
    %v101 = vld [vmem:[%s11] sm:$0x1]
    %v103 = vperm.slane %v91, 0
    %vm105 = vcmask 261120
    %v107 = vsel %vm105, %v85, 0
    %v110 = vsel %vm105, %v86, 0
    %112 = vmatpush.msra.mxu0 0.0
    %113 = vmatpush.msra.mxu0 0.0
    %114 = vmatpush.msra.mxu0 0.0
    %115 = vmatpush.msra.mxu0 0.0
    %116 = vmatpush.msra.mxu0 0.0
    %117 = vmatpush.msra.mxu0 0.0
    %118 = vmatpush.msra.mxu0 0.0
    %119 = vmatpush.msra.mxu0 0.0
    %120 = vmatpush.msra.mxu0 0.0
    %121 = vmatpush.msra.mxu0 0.0
    %122 = vmatpush.msra.mxu0 0.0
    %123 = vmatpush.msra.mxu0 0.0
    %124 = vmatpush.msra.mxu0 %v90
    %125 = vmatpush.msra.mxu0 %v89
    %126 = vmatpush.msra.mxu0 %v88
    %127 = vmatpush.msra.mxu0 %v87
    %128 = vmatmul.f32.gmra.mxu0 %v107
    %v129 = vpop.f32.mrf.mxu0
    %v130 = vadd.f32 %v103, %v129
    %131 = vmatmul.f32.gmra.mxu0 %v110
    %v132 = vpop.f32.mrf.mxu0
    %v133 = vadd.f32 %v103, %v132
    %134 = vdwg.mxu0
    %v135 = vmax.f32 %v130, 0.0
    %v136 = vmax.f32 %v133, 0.0
    %v138 = vperm.slane %v96, 0
    %v141 = vsel %vm105, %v135, 0
    %v144 = vsel %vm105, %v136, 0
    %146 = vmatpush.msra.mxu0 0.0
    %147 = vmatpush.msra.mxu0 0.0
    %148 = vmatpush.msra.mxu0 0.0
    %149 = vmatpush.msra.mxu0 0.0
    %150 = vmatpush.msra.mxu0 0.0
    %151 = vmatpush.msra.mxu0 0.0
    %152 = vmatpush.msra.mxu0 0.0
    %153 = vmatpush.msra.mxu0 0.0
    %154 = vmatpush.msra.mxu0 0.0
    %155 = vmatpush.msra.mxu0 0.0
    %156 = vmatpush.msra.mxu0 0.0
    %157 = vmatpush.msra.mxu0 0.0
    %158 = vmatpush.msra.mxu0 %v95
    %159 = vmatpush.msra.mxu0 %v94
    %160 = vmatpush.msra.mxu0 %v93
    %161 = vmatpush.msra.mxu0 %v92
    %162 = vmatmul.f32.gmra.mxu0 %v141
    %v163 = vpop.f32.mrf.mxu0
    %v164 = vadd.f32 %v138, %v163
    %165 = vmatmul.f32.gmra.mxu0 %v144
    %v166 = vpop.f32.mrf.mxu0
    %v167 = vadd.f32 %v138, %v166
    %168 = vdwg.mxu0
    %v169 = vmax.f32 %v164, 0.0
    %v170 = vmax.f32 %v167, 0.0
    %v172 = vperm.slane %v101, 0
    %v175 = vsel %vm105, %v169, 0
    %v178 = vsel %vm105, %v170, 0
    %180 = vmatpush.msra.mxu0 0.0
    %181 = vmatpush.msra.mxu0 0.0
    %182 = vmatpush.msra.mxu0 0.0
    %183 = vmatpush.msra.mxu0 0.0
    %184 = vmatpush.msra.mxu0 0.0
    %185 = vmatpush.msra.mxu0 0.0
    %186 = vmatpush.msra.mxu0 0.0
    %187 = vmatpush.msra.mxu0 0.0
    %188 = vmatpush.msra.mxu0 0.0
    %189 = vmatpush.msra.mxu0 0.0
    %190 = vmatpush.msra.mxu0 0.0
    %191 = vmatpush.msra.mxu0 0.0
    %192 = vmatpush.msra.mxu0 %v100
    %193 = vmatpush.msra.mxu0 %v99
    %194 = vmatpush.msra.mxu0 %v98
    %195 = vmatpush.msra.mxu0 %v97
    %196 = vmatmul.f32.gmra.mxu0 %v175
    %v197 = vpop.f32.mrf.mxu0
    %v198 = vadd.f32 %v172, %v197
    %199 = vmatmul.f32.gmra.mxu0 %v178
    %v200 = vpop.f32.mrf.mxu0
    %v201 = vadd.f32 %v172, %v200
    %202 = vdwg.mxu0
    %vm203 = vcmask 31744
    %204 = vst.msk [vmem:[#allocation4] sm:$0xff] %vm203, %v198
    %205 = vst.msk [vmem:[#allocation4 + $0x8] sm:$0xff] %vm203, %v201
    %v206 = vld [vmem:[%s12] sm:$0xff]
    %v207 = vld [vmem:[%s12 + $0x8] sm:$0xff]
    %v208 = vld [vmem:[%s12 + $0x10] sm:$0xff]
    %v209 = vld [vmem:[%s12 + $0x18] sm:$0xff]
    %v210 = vld [vmem:[%s13] sm:$0x1]
    %v211 = vld [vmem:[%s14] sm:$0xff]
    %v212 = vld [vmem:[%s14 + $0x8] sm:$0xff]
    %v213 = vld [vmem:[%s14 + $0x10] sm:$0xff]
    %v214 = vld [vmem:[%s14 + $0x18] sm:$0xff]
    %v215 = vld [vmem:[%s15] sm:$0x1]
    %v216 = vld [vmem:[%s16] sm:$0xff]
    %v217 = vld [vmem:[%s16 + $0x8] sm:$0xff]
    %v218 = vld [vmem:[%s16 + $0x10] sm:$0xff]
    %v219 = vld [vmem:[%s16 + $0x18] sm:$0xff]
    %v220 = vld [vmem:[#allocation2] sm:$0x1]
    %v222 = vperm.slane %v210, 0
    %224 = vmatpush.msra.mxu0 0.0
    %225 = vmatpush.msra.mxu0 0.0
    %226 = vmatpush.msra.mxu0 0.0
    %227 = vmatpush.msra.mxu0 0.0
    %228 = vmatpush.msra.mxu0 0.0
    %229 = vmatpush.msra.mxu0 0.0
    %230 = vmatpush.msra.mxu0 0.0
    %231 = vmatpush.msra.mxu0 0.0
    %232 = vmatpush.msra.mxu0 0.0
    %233 = vmatpush.msra.mxu0 0.0
    %234 = vmatpush.msra.mxu0 0.0
    %235 = vmatpush.msra.mxu0 0.0
    %236 = vmatpush.msra.mxu0 %v209
    %237 = vmatpush.msra.mxu0 %v208
    %238 = vmatpush.msra.mxu0 %v207
    %239 = vmatpush.msra.mxu0 %v206
    %240 = vmatmul.f32.gmra.mxu0 %v107
    %v241 = vpop.f32.mrf.mxu0
    %v242 = vadd.f32 %v222, %v241
    %243 = vmatmul.f32.gmra.mxu0 %v110
    %v244 = vpop.f32.mrf.mxu0
    %v245 = vadd.f32 %v222, %v244
    %246 = vdwg.mxu0
    %v247 = vmax.f32 %v242, 0.0
    %v248 = vmax.f32 %v245, 0.0
    %v250 = vperm.slane %v215, 0
    %v253 = vsel %vm105, %v247, 0
    %v256 = vsel %vm105, %v248, 0
    %258 = vmatpush.msra.mxu0 0.0
    %259 = vmatpush.msra.mxu0 0.0
    %260 = vmatpush.msra.mxu0 0.0
    %261 = vmatpush.msra.mxu0 0.0
    %262 = vmatpush.msra.mxu0 0.0
    %263 = vmatpush.msra.mxu0 0.0
    %264 = vmatpush.msra.mxu0 0.0
    %265 = vmatpush.msra.mxu0 0.0
    %266 = vmatpush.msra.mxu0 0.0
    %267 = vmatpush.msra.mxu0 0.0
    %268 = vmatpush.msra.mxu0 0.0
    %269 = vmatpush.msra.mxu0 0.0
    %270 = vmatpush.msra.mxu0 %v214
    %271 = vmatpush.msra.mxu0 %v213
    %272 = vmatpush.msra.mxu0 %v212
    %273 = vmatpush.msra.mxu0 %v211
    %274 = vmatmul.f32.gmra.mxu0 %v253
    %v275 = vpop.f32.mrf.mxu0
    %v276 = vadd.f32 %v250, %v275
    %277 = vmatmul.f32.gmra.mxu0 %v256
    %v278 = vpop.f32.mrf.mxu0
    %v279 = vadd.f32 %v250, %v278
    %280 = vdwg.mxu0
    %v281 = vmax.f32 %v276, 0.0
    %v282 = vmax.f32 %v279, 0.0
    %v284 = vperm.slane %v220, 0
    %v287 = vsel %vm105, %v281, 0
    %v290 = vsel %vm105, %v282, 0
    %292 = vmatpush.msra.mxu0 0.0
    %293 = vmatpush.msra.mxu0 0.0
    %294 = vmatpush.msra.mxu0 0.0
    %295 = vmatpush.msra.mxu0 0.0
    %296 = vmatpush.msra.mxu0 0.0
    %297 = vmatpush.msra.mxu0 0.0
    %298 = vmatpush.msra.mxu0 0.0
    %299 = vmatpush.msra.mxu0 0.0
    %300 = vmatpush.msra.mxu0 0.0
    %301 = vmatpush.msra.mxu0 0.0
    %302 = vmatpush.msra.mxu0 0.0
    %303 = vmatpush.msra.mxu0 0.0
    %304 = vmatpush.msra.mxu0 %v219
    %305 = vmatpush.msra.mxu0 %v218
    %306 = vmatpush.msra.mxu0 %v217
    %307 = vmatpush.msra.mxu0 %v216
    %308 = vmatmul.f32.gmra.mxu0 %v287
    %v309 = vpop.f32.mrf.mxu0
    %v310 = vadd.f32 %v284, %v309
    %311 = vmatmul.f32.gmra.mxu0 %v290
    %v312 = vpop.f32.mrf.mxu0
    %v313 = vadd.f32 %v284, %v312
    %314 = vdwg.mxu0
    %317 = vrot.lane.b32.xlu0 %v310, 4
    %v318 = vpop.permute.xlu0 %317
    %319 = vrot.lane.b32.xlu0 %v313, 4
    %v320 = vpop.permute.xlu0 %319
    %vm323 = vcmask 39968
    %324 = vst.msk [vmem:[#allocation4] sm:$0xff] %vm323, %v318
    %325 = vst.msk [vmem:[#allocation4 + $0x8] sm:$0xff] %vm323, %v320
    %v326 = vld [vmem:[%s18] sm:$0xff]
    %v327 = vld [vmem:[%s18 + $0x8] sm:$0xff]
    %v328 = vld [vmem:[%s18 + $0x10] sm:$0xff]
    %v329 = vld [vmem:[%s18 + $0x18] sm:$0xff]
    %330 = vmatpush.msra.mxu0 0.0
    %331 = vmatpush.msra.mxu0 0.0
    %332 = vmatpush.msra.mxu0 0.0
    %333 = vmatpush.msra.mxu0 0.0
    %334 = vmatpush.msra.mxu0 0.0
    %335 = vmatpush.msra.mxu0 0.0
    %336 = vmatpush.msra.mxu0 0.0
    %337 = vmatpush.msra.mxu0 0.0
    %338 = vmatpush.msra.mxu0 0.0
    %339 = vmatpush.msra.mxu0 0.0
    %340 = vmatpush.msra.mxu0 0.0
    %341 = vmatpush.msra.mxu0 0.0
    %342 = vmatpush.msra.mxu0 %v329
    %343 = vmatpush.msra.mxu0 %v328
    %344 = vmatpush.msra.mxu0 %v327
    %345 = vmatpush.msra.mxu0 %v326
    %346 = vmatmul.f32.gmra.mxu0 %v107
    %v347 = vpop.f32.mrf.mxu0
    %v348 = vadd.f32 0.0, %v347
    %349 = vmatmul.f32.gmra.mxu0 %v110
    %v350 = vpop.f32.mrf.mxu0
    %v351 = vadd.f32 0.0, %v350
    %352 = vdwg.mxu0
    %v353 = vld [vmem:[%s19] sm:$0xff]
    %v354 = vld [vmem:[%s19 + $0x8] sm:$0xff]
    %v355 = vld [vmem:[%s19 + $0x10] sm:$0xff]
    %v356 = vld [vmem:[%s19 + $0x18] sm:$0xff]
    %357 = vmatpush.msra.mxu0 0.0
    %358 = vmatpush.msra.mxu0 0.0
    %359 = vmatpush.msra.mxu0 0.0
    %360 = vmatpush.msra.mxu0 0.0
    %361 = vmatpush.msra.mxu0 0.0
    %362 = vmatpush.msra.mxu0 0.0
    %363 = vmatpush.msra.mxu0 0.0
    %364 = vmatpush.msra.mxu0 0.0
    %365 = vmatpush.msra.mxu0 0.0
    %366 = vmatpush.msra.mxu0 0.0
    %367 = vmatpush.msra.mxu0 0.0
    %368 = vmatpush.msra.mxu0 0.0
    %369 = vmatpush.msra.mxu0 %v356
    %370 = vmatpush.msra.mxu0 %v355
    %371 = vmatpush.msra.mxu0 %v354
    %372 = vmatpush.msra.mxu0 %v353
    %373 = vmatmul.f32.gmra.mxu0 %v107
    %v374 = vpop.f32.mrf.mxu0
    %v375 = vadd.f32 0.0, %v374
    %376 = vmatmul.f32.gmra.mxu0 %v110
    %v377 = vpop.f32.mrf.mxu0
    %v378 = vadd.f32 0.0, %v377
    %379 = vdwg.mxu0
    %v380 = vld [vmem:[%s1] sm:$0xff]
    %v381 = vld [vmem:[%s1 + $0x8] sm:$0xff]
    %v382 = vld [vmem:[%s1 + $0x10] sm:$0xff]
    %v383 = vld [vmem:[%s1 + $0x18] sm:$0xff]
    %v384 = vld [vmem:[%s1 + $0x20] sm:$0xff]
    %v385 = vld [vmem:[%s1 + $0x28] sm:$0xff]
    %v386 = vld [vmem:[%s1 + $0x30] sm:$0xff]
    %v387 = vld [vmem:[%s1 + $0x38] sm:$0xff]
    %v388 = vld [vmem:[%s1 + $0x40] sm:$0xff]
    %v389 = vld [vmem:[%s1 + $0x48] sm:$0xff]
    %v390 = vld [vmem:[%s1 + $0x50] sm:$0xff]
    %v391 = vld [vmem:[%s1 + $0x58] sm:$0xff]
    %v392 = vld [vmem:[%s1 + $0x60] sm:$0xff]
    %v393 = vld [vmem:[%s1 + $0x68] sm:$0xff]
    %v394 = vld [vmem:[%s1 + $0x70] sm:$0xff]
    %v395 = vld [vmem:[%s1 + $0x78] sm:$0xff]
    %v396 = vlaneseq
    %v397 = vand.u32 %v396, 127
    %398 = vset.pattern.permute.xlu0 0
    %399 = vperm.xlu0 %398, %v380
    %v400 = vpop.permute.xlu0 %399
    %401 = vset.pattern.permute.xlu0 0
    %402 = vperm.xlu0 %401, %v381
    %v403 = vpop.permute.xlu0 %402
    %404 = vset.pattern.permute.xlu0 0
    %405 = vperm.xlu0 %404, %v382
    %v406 = vpop.permute.xlu0 %405
    %407 = vset.pattern.permute.xlu0 0
    %408 = vperm.xlu0 %407, %v383
    %v409 = vpop.permute.xlu0 %408
    %410 = vset.pattern.permute.xlu0 0
    %411 = vperm.xlu0 %410, %v384
    %v412 = vpop.permute.xlu0 %411
    %413 = vset.pattern.permute.xlu0 0
    %414 = vperm.xlu0 %413, %v385
    %v415 = vpop.permute.xlu0 %414
    %416 = vset.pattern.permute.xlu0 0
    %417 = vperm.xlu0 %416, %v386
    %v418 = vpop.permute.xlu0 %417
    %419 = vset.pattern.permute.xlu0 0
    %420 = vperm.xlu0 %419, %v387
    %v421 = vpop.permute.xlu0 %420
    %422 = vset.pattern.permute.xlu0 0
    %423 = vperm.xlu0 %422, %v388
    %v424 = vpop.permute.xlu0 %423
    %425 = vset.pattern.permute.xlu0 0
    %426 = vperm.xlu0 %425, %v389
    %v427 = vpop.permute.xlu0 %426
    %428 = vset.pattern.permute.xlu0 0
    %429 = vperm.xlu0 %428, %v390
    %v430 = vpop.permute.xlu0 %429
    %431 = vset.pattern.permute.xlu0 0
    %432 = vperm.xlu0 %431, %v391
    %v433 = vpop.permute.xlu0 %432
    %434 = vset.pattern.permute.xlu0 0
    %435 = vperm.xlu0 %434, %v392
    %v436 = vpop.permute.xlu0 %435
    %437 = vset.pattern.permute.xlu0 0
    %438 = vperm.xlu0 %437, %v393
    %v439 = vpop.permute.xlu0 %438
    %440 = vset.pattern.permute.xlu0 0
    %441 = vperm.xlu0 %440, %v394
    %v442 = vpop.permute.xlu0 %441
    %443 = vset.pattern.permute.xlu0 0
    %444 = vperm.xlu0 %443, %v395
    %v445 = vpop.permute.xlu0 %444
    %vm446 = vcmp.eq.s32.totalorder %v400, %v397
    %vm447 = vcmp.eq.s32.totalorder %v403, %v397
    %vm448 = vcmp.eq.s32.totalorder %v406, %v397
    %vm449 = vcmp.eq.s32.totalorder %v409, %v397
    %vm450 = vcmp.eq.s32.totalorder %v412, %v397
    %vm451 = vcmp.eq.s32.totalorder %v415, %v397
    %vm452 = vcmp.eq.s32.totalorder %v418, %v397
    %vm453 = vcmp.eq.s32.totalorder %v421, %v397
    %vm454 = vcmp.eq.s32.totalorder %v424, %v397
    %vm455 = vcmp.eq.s32.totalorder %v427, %v397
    %vm456 = vcmp.eq.s32.totalorder %v430, %v397
    %vm457 = vcmp.eq.s32.totalorder %v433, %v397
    %vm458 = vcmp.eq.s32.totalorder %v436, %v397
    %vm459 = vcmp.eq.s32.totalorder %v439, %v397
    %vm460 = vcmp.eq.s32.totalorder %v442, %v397
    %vm461 = vcmp.eq.s32.totalorder %v445, %v397
    %v462 = vsel %vm446, 1, 0
    %v463 = vsel %vm447, 1, 0
    %v464 = vsel %vm448, 1, 0
    %v465 = vsel %vm449, 1, 0
    %v466 = vsel %vm450, 1, 0
    %v467 = vsel %vm451, 1, 0
    %v468 = vsel %vm452, 1, 0
    %v469 = vsel %vm453, 1, 0
    %v470 = vsel %vm454, 1, 0
    %v471 = vsel %vm455, 1, 0
    %v472 = vsel %vm456, 1, 0
    %v473 = vsel %vm457, 1, 0
    %v474 = vsel %vm458, 1, 0
    %v475 = vsel %vm459, 1, 0
    %v476 = vsel %vm460, 1, 0
    %v477 = vsel %vm461, 1, 0
    %v478 = vcvt.s32.f32 %v462
    %v479 = vcvt.s32.f32 %v463
    %v480 = vcvt.s32.f32 %v464
    %v481 = vcvt.s32.f32 %v465
    %v482 = vcvt.s32.f32 %v466
    %v483 = vcvt.s32.f32 %v467
    %v484 = vcvt.s32.f32 %v468
    %v485 = vcvt.s32.f32 %v469
    %v486 = vcvt.s32.f32 %v470
    %v487 = vcvt.s32.f32 %v471
    %v488 = vcvt.s32.f32 %v472
    %v489 = vcvt.s32.f32 %v473
    %v490 = vcvt.s32.f32 %v474
    %v491 = vcvt.s32.f32 %v475
    %v492 = vcvt.s32.f32 %v476
    %v493 = vcvt.s32.f32 %v477
    %v494 = vld [vmem:[%s3] sm:$0xff]
    %v495 = vld [vmem:[%s3 + $0x8] sm:$0xff]
    %v496 = vld [vmem:[%s3 + $0x10] sm:$0xff]
    %v497 = vld [vmem:[%s3 + $0x18] sm:$0xff]
    %v498 = vld [vmem:[%s3 + $0x20] sm:$0xff]
    %v499 = vld [vmem:[%s3 + $0x28] sm:$0xff]
    %v500 = vld [vmem:[%s3 + $0x30] sm:$0xff]
    %v501 = vld [vmem:[%s3 + $0x38] sm:$0xff]
    %v502 = vld [vmem:[%s3 + $0x40] sm:$0xff]
    %v503 = vld [vmem:[%s3 + $0x48] sm:$0xff]
    %v504 = vld [vmem:[%s3 + $0x50] sm:$0xff]
    %v505 = vld [vmem:[%s3 + $0x58] sm:$0xff]
    %v506 = vld [vmem:[%s3 + $0x60] sm:$0xff]
    %v507 = vld [vmem:[%s3 + $0x68] sm:$0xff]
    %v508 = vld [vmem:[%s3 + $0x70] sm:$0xff]
    %v509 = vld [vmem:[%s3 + $0x78] sm:$0xff]
    %vm510 = vcmask 130048
    %v512 = vsel %vm510, %v478, 0
    %v515 = vsel %vm510, %v479, 0
    %v518 = vsel %vm510, %v480, 0
    %v521 = vsel %vm510, %v481, 0
    %v524 = vsel %vm510, %v482, 0
    %v527 = vsel %vm510, %v483, 0
    %v530 = vsel %vm510, %v484, 0
    %v533 = vsel %vm510, %v485, 0
    %v536 = vsel %vm510, %v486, 0
    %v539 = vsel %vm510, %v487, 0
    %v542 = vsel %vm510, %v488, 0
    %v545 = vsel %vm510, %v489, 0
    %v548 = vsel %vm510, %v490, 0
    %v551 = vsel %vm510, %v491, 0
    %v554 = vsel %vm510, %v492, 0
    %v557 = vsel %vm510, %v493, 0
    %559 = vmatpush.msra.mxu0 0.0
    %560 = vmatpush.msra.mxu0 0.0
    %561 = vmatpush.msra.mxu0 0.0
    %562 = vmatpush.msra.mxu0 0.0
    %563 = vmatpush.msra.mxu0 0.0
    %564 = vmatpush.msra.mxu0 0.0
    %565 = vmatpush.msra.mxu0 0.0
    %566 = vmatpush.msra.mxu0 0.0
    %567 = vmatpush.msra.mxu0 0.0
    %568 = vmatpush.msra.mxu0 0.0
    %569 = vmatpush.msra.mxu0 0.0
    %570 = vmatpush.msra.mxu0 0.0
    %571 = vmatpush.msra.mxu0 0.0
    %572 = vmatpush.msra.mxu0 0.0
    %573 = vmatpush.msra.mxu0 %v378
    %574 = vmatpush.msra.mxu0 %v375
    %575 = vmatmul.f32.gmra.mxu0 %v512
    %v576 = vpop.f32.mrf.mxu0
    %v577 = vadd.f32 0.0, %v576
    %578 = vmatmul.f32.gmra.mxu0 %v515
    %v579 = vpop.f32.mrf.mxu0
    %v580 = vadd.f32 0.0, %v579
    %581 = vmatmul.f32.gmra.mxu0 %v518
    %v582 = vpop.f32.mrf.mxu0
    %v583 = vadd.f32 0.0, %v582
    %584 = vmatmul.f32.gmra.mxu0 %v521
    %v585 = vpop.f32.mrf.mxu0
    %v586 = vadd.f32 0.0, %v585
    %587 = vmatmul.f32.gmra.mxu0 %v524
    %v588 = vpop.f32.mrf.mxu0
    %v589 = vadd.f32 0.0, %v588
    %590 = vmatmul.f32.gmra.mxu0 %v527
    %v591 = vpop.f32.mrf.mxu0
    %v592 = vadd.f32 0.0, %v591
    %593 = vmatmul.f32.gmra.mxu0 %v530
    %v594 = vpop.f32.mrf.mxu0
    %v595 = vadd.f32 0.0, %v594
    %596 = vmatmul.f32.gmra.mxu0 %v533
    %v597 = vpop.f32.mrf.mxu0
    %v598 = vadd.f32 0.0, %v597
    %599 = vmatmul.f32.gmra.mxu0 %v536
    %v600 = vpop.f32.mrf.mxu0
    %v601 = vadd.f32 0.0, %v600
    %602 = vmatmul.f32.gmra.mxu0 %v539
    %v603 = vpop.f32.mrf.mxu0
    %v604 = vadd.f32 0.0, %v603
    %605 = vmatmul.f32.gmra.mxu0 %v542
    %v606 = vpop.f32.mrf.mxu0
    %v607 = vadd.f32 0.0, %v606
    %608 = vmatmul.f32.gmra.mxu0 %v545
    %v609 = vpop.f32.mrf.mxu0
    %v610 = vadd.f32 0.0, %v609
    %611 = vmatmul.f32.gmra.mxu0 %v548
    %v612 = vpop.f32.mrf.mxu0
    %v613 = vadd.f32 0.0, %v612
    %614 = vmatmul.f32.gmra.mxu0 %v551
    %v615 = vpop.f32.mrf.mxu0
    %v616 = vadd.f32 0.0, %v615
    %617 = vmatmul.f32.gmra.mxu0 %v554
    %v618 = vpop.f32.mrf.mxu0
    %v619 = vadd.f32 0.0, %v618
    %620 = vmatmul.f32.gmra.mxu0 %v557
    %v621 = vpop.f32.mrf.mxu0
    %v622 = vadd.f32 0.0, %v621
    %623 = vdwg.mxu0
    %v625 = vsel %vm510, %v494, 0
    %v628 = vsel %vm510, %v495, 0
    %v631 = vsel %vm510, %v496, 0
    %v634 = vsel %vm510, %v497, 0
    %v637 = vsel %vm510, %v498, 0
    %v640 = vsel %vm510, %v499, 0
    %v643 = vsel %vm510, %v500, 0
    %v646 = vsel %vm510, %v501, 0
    %v649 = vsel %vm510, %v502, 0
    %v652 = vsel %vm510, %v503, 0
    %v655 = vsel %vm510, %v504, 0
    %v658 = vsel %vm510, %v505, 0
    %v661 = vsel %vm510, %v506, 0
    %v664 = vsel %vm510, %v507, 0
    %v667 = vsel %vm510, %v508, 0
    %v670 = vsel %vm510, %v509, 0
    %672 = vmatpush.msra.mxu0 0.0
    %673 = vmatpush.msra.mxu0 0.0
    %674 = vmatpush.msra.mxu0 0.0
    %675 = vmatpush.msra.mxu0 0.0
    %676 = vmatpush.msra.mxu0 0.0
    %677 = vmatpush.msra.mxu0 0.0
    %678 = vmatpush.msra.mxu0 0.0
    %679 = vmatpush.msra.mxu0 0.0
    %680 = vmatpush.msra.mxu0 0.0
    %681 = vmatpush.msra.mxu0 0.0
    %682 = vmatpush.msra.mxu0 0.0
    %683 = vmatpush.msra.mxu0 0.0
    %684 = vmatpush.msra.mxu0 0.0
    %685 = vmatpush.msra.mxu0 0.0
    %686 = vmatpush.msra.mxu0 %v351
    %687 = vmatpush.msra.mxu0 %v348
    %688 = vmatmul.f32.gmra.mxu0 %v625
    %v689 = vpop.f32.mrf.mxu0
    %v690 = vadd.f32 %v577, %v689
    %691 = vmatmul.f32.gmra.mxu0 %v628
    %v692 = vpop.f32.mrf.mxu0
    %v693 = vadd.f32 %v580, %v692
    %694 = vmatmul.f32.gmra.mxu0 %v631
    %v695 = vpop.f32.mrf.mxu0
    %v696 = vadd.f32 %v583, %v695
    %697 = vmatmul.f32.gmra.mxu0 %v634
    %v698 = vpop.f32.mrf.mxu0
    %v699 = vadd.f32 %v586, %v698
    %700 = vmatmul.f32.gmra.mxu0 %v637
    %v701 = vpop.f32.mrf.mxu0
    %v702 = vadd.f32 %v589, %v701
    %703 = vmatmul.f32.gmra.mxu0 %v640
    %v704 = vpop.f32.mrf.mxu0
    %v705 = vadd.f32 %v592, %v704
    %706 = vmatmul.f32.gmra.mxu0 %v643
    %v707 = vpop.f32.mrf.mxu0
    %v708 = vadd.f32 %v595, %v707
    %709 = vmatmul.f32.gmra.mxu0 %v646
    %v710 = vpop.f32.mrf.mxu0
    %v711 = vadd.f32 %v598, %v710
    %712 = vmatmul.f32.gmra.mxu0 %v649
    %v713 = vpop.f32.mrf.mxu0
    %v714 = vadd.f32 %v601, %v713
    %715 = vmatmul.f32.gmra.mxu0 %v652
    %v716 = vpop.f32.mrf.mxu0
    %v717 = vadd.f32 %v604, %v716
    %718 = vmatmul.f32.gmra.mxu0 %v655
    %v719 = vpop.f32.mrf.mxu0
    %v720 = vadd.f32 %v607, %v719
    %721 = vmatmul.f32.gmra.mxu0 %v658
    %v722 = vpop.f32.mrf.mxu0
    %v723 = vadd.f32 %v610, %v722
    %724 = vmatmul.f32.gmra.mxu0 %v661
    %v725 = vpop.f32.mrf.mxu0
    %v726 = vadd.f32 %v613, %v725
    %727 = vmatmul.f32.gmra.mxu0 %v664
    %v728 = vpop.f32.mrf.mxu0
    %v729 = vadd.f32 %v616, %v728
    %730 = vmatmul.f32.gmra.mxu0 %v667
    %v731 = vpop.f32.mrf.mxu0
    %v732 = vadd.f32 %v619, %v731
    %733 = vmatmul.f32.gmra.mxu0 %v670
    %v734 = vpop.f32.mrf.mxu0
    %v735 = vadd.f32 %v622, %v734
    %736 = vdwg.mxu0
    %v737 = vld [vmem:[%s20] sm:$0x1]
    %v739 = vperm.slane %v737, 0
    %v741 = vadd.f32 %v690, %v739
    %v742 = vadd.f32 %v693, %v739
    %v743 = vadd.f32 %v696, %v739
    %v744 = vadd.f32 %v699, %v739
    %v745 = vadd.f32 %v702, %v739
    %v746 = vadd.f32 %v705, %v739
    %v747 = vadd.f32 %v708, %v739
    %v748 = vadd.f32 %v711, %v739
    %v749 = vadd.f32 %v714, %v739
    %v750 = vadd.f32 %v717, %v739
    %v751 = vadd.f32 %v720, %v739
    %v752 = vadd.f32 %v723, %v739
    %v753 = vadd.f32 %v726, %v739
    %v754 = vadd.f32 %v729, %v739
    %v755 = vadd.f32 %v732, %v739
    %v756 = vadd.f32 %v735, %v739
    %v757 = vmax.f32 %v741, 0.0
    %v758 = vmax.f32 %v742, 0.0
    %v759 = vmax.f32 %v743, 0.0
    %v760 = vmax.f32 %v744, 0.0
    %v761 = vmax.f32 %v745, 0.0
    %v762 = vmax.f32 %v746, 0.0
    %v763 = vmax.f32 %v747, 0.0
    %v764 = vmax.f32 %v748, 0.0
    %v765 = vmax.f32 %v749, 0.0
    %v766 = vmax.f32 %v750, 0.0
    %v767 = vmax.f32 %v751, 0.0
    %v768 = vmax.f32 %v752, 0.0
    %v769 = vmax.f32 %v753, 0.0
    %v770 = vmax.f32 %v754, 0.0
    %v771 = vmax.f32 %v755, 0.0
    %v772 = vmax.f32 %v756, 0.0
    %v773 = vld [vmem:[%s21] sm:$0xff]
    %v774 = vld [vmem:[%s21 + $0x8] sm:$0xff]
    %v775 = vld [vmem:[%s21 + $0x10] sm:$0xff]
    %v776 = vld [vmem:[%s21 + $0x18] sm:$0xff]
    %v777 = vld [vmem:[%s22] sm:$0x1]
    %v779 = vperm.slane %v777, 0
    %v782 = vsel %vm105, %v757, 0
    %v785 = vsel %vm105, %v758, 0
    %v788 = vsel %vm105, %v759, 0
    %v791 = vsel %vm105, %v760, 0
    %v794 = vsel %vm105, %v761, 0
    %v797 = vsel %vm105, %v762, 0
    %v800 = vsel %vm105, %v763, 0
    %v803 = vsel %vm105, %v764, 0
    %v806 = vsel %vm105, %v765, 0
    %v809 = vsel %vm105, %v766, 0
    %v812 = vsel %vm105, %v767, 0
    %v815 = vsel %vm105, %v768, 0
    %v818 = vsel %vm105, %v769, 0
    %v821 = vsel %vm105, %v770, 0
    %v824 = vsel %vm105, %v771, 0
    %v827 = vsel %vm105, %v772, 0
    %829 = vmatpush.msra.mxu0 0.0
    %830 = vmatpush.msra.mxu0 0.0
    %831 = vmatpush.msra.mxu0 0.0
    %832 = vmatpush.msra.mxu0 0.0
    %833 = vmatpush.msra.mxu0 0.0
    %834 = vmatpush.msra.mxu0 0.0
    %835 = vmatpush.msra.mxu0 0.0
    %836 = vmatpush.msra.mxu0 0.0
    %837 = vmatpush.msra.mxu0 0.0
    %838 = vmatpush.msra.mxu0 0.0
    %839 = vmatpush.msra.mxu0 0.0
    %840 = vmatpush.msra.mxu0 0.0
    %841 = vmatpush.msra.mxu0 %v776
    %842 = vmatpush.msra.mxu0 %v775
    %843 = vmatpush.msra.mxu0 %v774
    %844 = vmatpush.msra.mxu0 %v773
    %845 = vmatmul.f32.gmra.mxu0 %v782
    %v846 = vpop.f32.mrf.mxu0
    %v847 = vadd.f32 %v779, %v846
    %848 = vmatmul.f32.gmra.mxu0 %v785
    %v849 = vpop.f32.mrf.mxu0
    %v850 = vadd.f32 %v779, %v849
    %851 = vmatmul.f32.gmra.mxu0 %v788
    %v852 = vpop.f32.mrf.mxu0
    %v853 = vadd.f32 %v779, %v852
    %854 = vmatmul.f32.gmra.mxu0 %v791
    %v855 = vpop.f32.mrf.mxu0
    %v856 = vadd.f32 %v779, %v855
    %857 = vmatmul.f32.gmra.mxu0 %v794
    %v858 = vpop.f32.mrf.mxu0
    %v859 = vadd.f32 %v779, %v858
    %860 = vmatmul.f32.gmra.mxu0 %v797
    %v861 = vpop.f32.mrf.mxu0
    %v862 = vadd.f32 %v779, %v861
    %863 = vmatmul.f32.gmra.mxu0 %v800
    %v864 = vpop.f32.mrf.mxu0
    %v865 = vadd.f32 %v779, %v864
    %866 = vmatmul.f32.gmra.mxu0 %v803
    %v867 = vpop.f32.mrf.mxu0
    %v868 = vadd.f32 %v779, %v867
    %869 = vmatmul.f32.gmra.mxu0 %v806
    %v870 = vpop.f32.mrf.mxu0
    %v871 = vadd.f32 %v779, %v870
    %872 = vmatmul.f32.gmra.mxu0 %v809
    %v873 = vpop.f32.mrf.mxu0
    %v874 = vadd.f32 %v779, %v873
    %875 = vmatmul.f32.gmra.mxu0 %v812
    %v876 = vpop.f32.mrf.mxu0
    %v877 = vadd.f32 %v779, %v876
    %878 = vmatmul.f32.gmra.mxu0 %v815
    %v879 = vpop.f32.mrf.mxu0
    %v880 = vadd.f32 %v779, %v879
    %881 = vmatmul.f32.gmra.mxu0 %v818
    %v882 = vpop.f32.mrf.mxu0
    %v883 = vadd.f32 %v779, %v882
    %884 = vmatmul.f32.gmra.mxu0 %v821
    %v885 = vpop.f32.mrf.mxu0
    %v886 = vadd.f32 %v779, %v885
    %887 = vmatmul.f32.gmra.mxu0 %v824
    %v888 = vpop.f32.mrf.mxu0
    %v889 = vadd.f32 %v779, %v888
    %890 = vmatmul.f32.gmra.mxu0 %v827
    %v891 = vpop.f32.mrf.mxu0
    %v892 = vadd.f32 %v779, %v891
    %893 = vdwg.mxu0
    %v894 = vmax.f32 %v847, 0.0
    %v895 = vmax.f32 %v850, 0.0
    %v896 = vmax.f32 %v853, 0.0
    %v897 = vmax.f32 %v856, 0.0
    %v898 = vmax.f32 %v859, 0.0
    %v899 = vmax.f32 %v862, 0.0
    %v900 = vmax.f32 %v865, 0.0
    %v901 = vmax.f32 %v868, 0.0
    %v902 = vmax.f32 %v871, 0.0
    %v903 = vmax.f32 %v874, 0.0
    %v904 = vmax.f32 %v877, 0.0
    %v905 = vmax.f32 %v880, 0.0
    %v906 = vmax.f32 %v883, 0.0
    %v907 = vmax.f32 %v886, 0.0
    %v908 = vmax.f32 %v889, 0.0
    %v909 = vmax.f32 %v892, 0.0
    %v910 = vld [vmem:[%s23] sm:$0xff]
    %v911 = vld [vmem:[%s23 + $0x8] sm:$0xff]
    %v912 = vld [vmem:[%s23 + $0x10] sm:$0xff]
    %v913 = vld [vmem:[%s23 + $0x18] sm:$0xff]
    %v914 = vld [vmem:[#allocation3] sm:$0x1]
    %v916 = vperm.slane %v914, 0
    %v919 = vsel %vm105, %v894, 0
    %v922 = vsel %vm105, %v895, 0
    %v925 = vsel %vm105, %v896, 0
    %v928 = vsel %vm105, %v897, 0
    %v931 = vsel %vm105, %v898, 0
    %v934 = vsel %vm105, %v899, 0
    %v937 = vsel %vm105, %v900, 0
    %v940 = vsel %vm105, %v901, 0
    %v943 = vsel %vm105, %v902, 0
    %v946 = vsel %vm105, %v903, 0
    %v949 = vsel %vm105, %v904, 0
    %v952 = vsel %vm105, %v905, 0
    %v955 = vsel %vm105, %v906, 0
    %v958 = vsel %vm105, %v907, 0
    %v961 = vsel %vm105, %v908, 0
    %v964 = vsel %vm105, %v909, 0
    %966 = vmatpush.msra.mxu0 0.0
    %967 = vmatpush.msra.mxu0 0.0
    %968 = vmatpush.msra.mxu0 0.0
    %969 = vmatpush.msra.mxu0 0.0
    %970 = vmatpush.msra.mxu0 0.0
    %971 = vmatpush.msra.mxu0 0.0
    %972 = vmatpush.msra.mxu0 0.0
    %973 = vmatpush.msra.mxu0 0.0
    %974 = vmatpush.msra.mxu0 0.0
    %975 = vmatpush.msra.mxu0 0.0
    %976 = vmatpush.msra.mxu0 0.0
    %977 = vmatpush.msra.mxu0 0.0
    %978 = vmatpush.msra.mxu0 %v913
    %979 = vmatpush.msra.mxu0 %v912
    %980 = vmatpush.msra.mxu0 %v911
    %981 = vmatpush.msra.mxu0 %v910
    %982 = vmatmul.f32.gmra.mxu0 %v919
    %v983 = vpop.f32.mrf.mxu0
    %v984 = vadd.f32 %v916, %v983
    %985 = vmatmul.f32.gmra.mxu0 %v922
    %v986 = vpop.f32.mrf.mxu0
    %v987 = vadd.f32 %v916, %v986
    %988 = vmatmul.f32.gmra.mxu0 %v925
    %v989 = vpop.f32.mrf.mxu0
    %v990 = vadd.f32 %v916, %v989
    %991 = vmatmul.f32.gmra.mxu0 %v928
    %v992 = vpop.f32.mrf.mxu0
    %v993 = vadd.f32 %v916, %v992
    %994 = vmatmul.f32.gmra.mxu0 %v931
    %v995 = vpop.f32.mrf.mxu0
    %v996 = vadd.f32 %v916, %v995
    %997 = vmatmul.f32.gmra.mxu0 %v934
    %v998 = vpop.f32.mrf.mxu0
    %v999 = vadd.f32 %v916, %v998
    %1000 = vmatmul.f32.gmra.mxu0 %v937
    %v1001 = vpop.f32.mrf.mxu0
    %v1002 = vadd.f32 %v916, %v1001
    %1003 = vmatmul.f32.gmra.mxu0 %v940
    %v1004 = vpop.f32.mrf.mxu0
    %v1005 = vadd.f32 %v916, %v1004
    %1006 = vmatmul.f32.gmra.mxu0 %v943
    %v1007 = vpop.f32.mrf.mxu0
    %v1008 = vadd.f32 %v916, %v1007
    %1009 = vmatmul.f32.gmra.mxu0 %v946
    %v1010 = vpop.f32.mrf.mxu0
    %v1011 = vadd.f32 %v916, %v1010
    %1012 = vmatmul.f32.gmra.mxu0 %v949
    %v1013 = vpop.f32.mrf.mxu0
    %v1014 = vadd.f32 %v916, %v1013
    %1015 = vmatmul.f32.gmra.mxu0 %v952
    %v1016 = vpop.f32.mrf.mxu0
    %v1017 = vadd.f32 %v916, %v1016
    %1018 = vmatmul.f32.gmra.mxu0 %v955
    %v1019 = vpop.f32.mrf.mxu0
    %v1020 = vadd.f32 %v916, %v1019
    %1021 = vmatmul.f32.gmra.mxu0 %v958
    %v1022 = vpop.f32.mrf.mxu0
    %v1023 = vadd.f32 %v916, %v1022
    %1024 = vmatmul.f32.gmra.mxu0 %v961
    %v1025 = vpop.f32.mrf.mxu0
    %v1026 = vadd.f32 %v916, %v1025
    %1027 = vmatmul.f32.gmra.mxu0 %v964
    %v1028 = vpop.f32.mrf.mxu0
    %v1029 = vadd.f32 %v916, %v1028
    %1030 = vdwg.mxu0
    %v1031 = vld [vmem:[%s4] sm:$0xff]
    %v1032 = vld [vmem:[%s4 + $0x8] sm:$0xff]
    %v1033 = vld [vmem:[%s5] sm:$0xff]
    %v1034 = vld [vmem:[%s5 + $0x8] sm:$0xff]
    %v1035 = vld [vmem:[%s5 + $0x10] sm:$0xff]
    %v1036 = vld [vmem:[%s5 + $0x18] sm:$0xff]
    %v1037 = vld [vmem:[%s5 + $0x20] sm:$0xff]
    %v1038 = vld [vmem:[%s5 + $0x28] sm:$0xff]
    %v1039 = vld [vmem:[%s5 + $0x30] sm:$0xff]
    %v1040 = vld [vmem:[%s5 + $0x38] sm:$0xff]
    %v1041 = vld [vmem:[%s5 + $0x40] sm:$0xff]
    %v1042 = vld [vmem:[%s5 + $0x48] sm:$0xff]
    %v1043 = vld [vmem:[%s5 + $0x50] sm:$0xff]
    %v1044 = vld [vmem:[%s5 + $0x58] sm:$0xff]
    %v1045 = vld [vmem:[%s5 + $0x60] sm:$0xff]
    %v1046 = vld [vmem:[%s5 + $0x68] sm:$0xff]
    %v1047 = vld [vmem:[%s5 + $0x70] sm:$0xff]
    %v1048 = vld [vmem:[%s5 + $0x78] sm:$0xff]
    %1050 = vset.pattern.permute.xlu0 0
    %1051 = vperm.xlu0 %1050, %v984
    %v1052 = vpop.permute.xlu0 %1051
    %1055 = vset.pattern.permute.xlu0 0
    %1056 = vperm.xlu0 %1055, %v987
    %v1057 = vpop.permute.xlu0 %1056
    %1060 = vset.pattern.permute.xlu0 0
    %1061 = vperm.xlu0 %1060, %v990
    %v1062 = vpop.permute.xlu0 %1061
    %1065 = vset.pattern.permute.xlu0 0
    %1066 = vperm.xlu0 %1065, %v993
    %v1067 = vpop.permute.xlu0 %1066
    %1070 = vset.pattern.permute.xlu0 0
    %1071 = vperm.xlu0 %1070, %v996
    %v1072 = vpop.permute.xlu0 %1071
    %1075 = vset.pattern.permute.xlu0 0
    %1076 = vperm.xlu0 %1075, %v999
    %v1077 = vpop.permute.xlu0 %1076
    %1080 = vset.pattern.permute.xlu0 0
    %1081 = vperm.xlu0 %1080, %v1002
    %v1082 = vpop.permute.xlu0 %1081
    %1085 = vset.pattern.permute.xlu0 0
    %1086 = vperm.xlu0 %1085, %v1005
    %v1087 = vpop.permute.xlu0 %1086
    %1090 = vset.pattern.permute.xlu0 0
    %1091 = vperm.xlu0 %1090, %v1008
    %v1092 = vpop.permute.xlu0 %1091
    %1095 = vset.pattern.permute.xlu0 0
    %1096 = vperm.xlu0 %1095, %v1011
    %v1097 = vpop.permute.xlu0 %1096
    %1100 = vset.pattern.permute.xlu0 0
    %1101 = vperm.xlu0 %1100, %v1014
    %v1102 = vpop.permute.xlu0 %1101
    %1105 = vset.pattern.permute.xlu0 0
    %1106 = vperm.xlu0 %1105, %v1017
    %v1107 = vpop.permute.xlu0 %1106
    %1110 = vset.pattern.permute.xlu0 0
    %1111 = vperm.xlu0 %1110, %v1020
    %v1112 = vpop.permute.xlu0 %1111
    %1115 = vset.pattern.permute.xlu0 0
    %1116 = vperm.xlu0 %1115, %v1023
    %v1117 = vpop.permute.xlu0 %1116
    %1120 = vset.pattern.permute.xlu0 0
    %1121 = vperm.xlu0 %1120, %v1026
    %v1122 = vpop.permute.xlu0 %1121
    %1125 = vset.pattern.permute.xlu0 0
    %1126 = vperm.xlu0 %1125, %v1029
    %v1127 = vpop.permute.xlu0 %1126
    %v1129 = vmul.f32 %v1052, %v1033
    %v1130 = vmul.f32 %v1057, %v1034
    %v1131 = vmul.f32 %v1062, %v1035
    %v1132 = vmul.f32 %v1067, %v1036
    %v1133 = vmul.f32 %v1072, %v1037
    %v1134 = vmul.f32 %v1077, %v1038
    %v1135 = vmul.f32 %v1082, %v1039
    %v1136 = vmul.f32 %v1087, %v1040
    %v1137 = vmul.f32 %v1092, %v1041
    %v1138 = vmul.f32 %v1097, %v1042
    %v1139 = vmul.f32 %v1102, %v1043
    %v1140 = vmul.f32 %v1107, %v1044
    %v1141 = vmul.f32 %v1112, %v1045
    %v1142 = vmul.f32 %v1117, %v1046
    %v1143 = vmul.f32 %v1122, %v1047
    %v1144 = vmul.f32 %v1127, %v1048
    %1145 = vmatpush.msra.mxu0 %v1144
    %1146 = vmatpush.msra.mxu0 %v1143
    %1147 = vmatpush.msra.mxu0 %v1142
    %1148 = vmatpush.msra.mxu0 %v1141
    %1149 = vmatpush.msra.mxu0 %v1140
    %1150 = vmatpush.msra.mxu0 %v1139
    %1151 = vmatpush.msra.mxu0 %v1138
    %1152 = vmatpush.msra.mxu0 %v1137
    %1153 = vmatpush.msra.mxu0 %v1136
    %1154 = vmatpush.msra.mxu0 %v1135
    %1155 = vmatpush.msra.mxu0 %v1134
    %1156 = vmatpush.msra.mxu0 %v1133
    %1157 = vmatpush.msra.mxu0 %v1132
    %1158 = vmatpush.msra.mxu0 %v1131
    %1159 = vmatpush.msra.mxu0 %v1130
    %1160 = vmatpush.msra.mxu0 %v1129
    %1161 = vmatmul.f32.gmra.mxu0 %v1031
    %v1162 = vpop.f32.mrf.mxu0
    %v1163 = vadd.f32 0.0, %v1162
    %1164 = vmatmul.f32.gmra.mxu0 %v1032
    %v1165 = vpop.f32.mrf.mxu0
    %v1166 = vadd.f32 0.0, %v1165
    %1167 = vdwg.mxu0
    %v1168 = vld [vmem:[%s2] sm:$0xff]
    %v1169 = vld [vmem:[%s2 + $0x8] sm:$0xff]
    %vm1170 = vcmp.gt.s32.totalorder %v1168, 0
    %vm1171 = vcmp.gt.s32.totalorder %v1169, 0
    %v1172 = vsel %vm1170, %v1163, -1e+10
    %v1173 = vsel %vm1171, %v1166, -1e+10
    %1176 = vrot.lane.b32.xlu0 %v1172, 5
    %v1177 = vpop.permute.xlu0 %1176
    %1178 = vrot.lane.b32.xlu0 %v1173, 5
    %v1179 = vpop.permute.xlu0 %1178
    %vm1182 = vcmask 105512
    %1183 = vst.msk [vmem:[#allocation4] sm:$0xff] %vm1182, %v1177
    %1184 = vst.msk [vmem:[#allocation4 + $0x8] sm:$0xff] %vm1182, %v1179
    // Predicated region
    $region102: #{tpu_custom_call.1} parent=1 // pred_check
      _
    $region103: #{tpu_custom_call.1} parent=1 // pred_check_branch
      %1186 = sbr.rel (0) target = $region105
    $region104: #{tpu_custom_call.1} parent=1 // pred_region
      %1188 = vsyncadd [#allocation5], 0
      %s1189 = sshll.u32 [#allocation4], 4
      %s1190 = int_to_ptr.vmem [resolvable:$true] %s1189
      %s1191 = sshll.u32 %s25, 4
      %s1192 = int_to_ptr.hbm [resolvable:$true] %s1191
      %1197 = dma.vmem_to_hbm [thread:$0]  %s1190, 256, %s1192, [#allocation5], 128, 128, 8
    $region105: #{tpu_custom_call.1} parent=1 // pred_fallthru
      _
    // Predicated region
    $region106: #{tpu_custom_call.1} parent=1 // pred_check
      _
    $region107: #{tpu_custom_call.1} parent=1 // pred_check_branch
      %1199 = sbr.rel (0) target = $region109
    $region108: #{tpu_custom_call.1} parent=1 // pred_region
      %1201 = dma.done [#allocation5], 256
    $region109: #{tpu_custom_call.1} parent=1 // pred_fallthru
      _
    %1202 = vsyncpa [#allocation5], 1

</llo_original>
